<compile_context>
chip_gen: v6e
topology: v6e:2x2x1
jax: 0.10.0
libtpu: 0.0.40
codegen_flags: <defaults>
</compile_context>

<pallas_src>
import jax
import jax.numpy as jnp
import numpy as np
from jax import lax
from jax.experimental import pallas as pl
from jax.experimental.pallas import tpu as pltpu

NUM_EMBEDDINGS = 128                      # n_embd (C); module uses 384, scaled down
N_HEAD = 4
HEAD_SIZE = NUM_EMBEDDINGS // N_HEAD      # 32
HIDDEN = 4 * NUM_EMBEDDINGS               # 512
SEQ = 16                                  # T (<= BLOCK_SIZE; causal mask on [:T,:T])
BATCH = 2
LN_EPS = 1e-5

# TODO(synk): nn.Dropout layers are identity in eval mode; training-mode stochastic
# dropout is not implemented.


def block_kernel(x_ref,
                 ln1_g_ref, ln1_b_ref, ln2_g_ref, ln2_b_ref,
                 head_mask_ref, wqkv_ref, w1_ref, b1_ref, w2_ref, b2_ref,
                 o_ref):
    B, T, C = x_ref.shape
    H, hs = N_HEAD, HEAD_SIZE
    bf16 = jnp.bfloat16

    x = x_ref[...].reshape(B * T, C)                       # fold batch into matmul M

    # ---- LayerNorm 1 (f32, VPU) ----
    mu = jnp.mean(x, axis=-1, keepdims=True)
    var = jnp.mean((x - mu) ** 2, axis=-1, keepdims=True)
    h1 = (x - mu) * lax.rsqrt(var + LN_EPS) * ln1_g_ref[0] + ln1_b_ref[0]

    # ---- fused QKV projection: one (B*T, C) x (C, 3C) bf16 matmul, f32 acc ----
    qkv = jnp.dot(h1.astype(bf16), wqkv_ref[...],
                  preferred_element_type=jnp.float32)      # (B*T, 3C)
    q = qkv[:, :C].reshape(B, T, C)
    k = qkv[:, C:2 * C].reshape(B, T, C)
    v = qkv[:, 2 * C:].reshape(B, T, C)

    # ---- multi-head causal attention, heads folded into matmul M ----
    # head_mask[h, 0, c] = 1 iff channel c belongs to head h.  Masking q's channels
    # per head and stacking heads along M lets a single batched contraction over the
    # full C compute every head's scores (off-head products are exact zeros): no
    # 32-lane slices, no explicit k.T, no lane concat.
    head_mask = head_mask_ref[...]                          # (H, 1, C) f32
    qh = (q[:, None, :, :] * head_mask).reshape(B, H * T, C)

    scale = hs ** -0.5
    scores = jnp.einsum('bmc,bsc->bms', qh.astype(bf16), k.astype(bf16),
                        preferred_element_type=jnp.float32) * scale   # (B, H*T, T)

    # causal mask for row m = h*T + t: allow keys s <= t (every row keeps its diagonal)
    t_of_m = lax.broadcasted_iota(jnp.int32, (H * T, T), 0) % T
    s_idx = lax.broadcasted_iota(jnp.int32, (H * T, T), 1)
    scores = jnp.where(s_idx <= t_of_m, scores, -jnp.inf)

    scores = scores - jnp.max(scores, axis=-1, keepdims=True)
    p = jnp.exp(scores)
    p = p * pl.reciprocal(jnp.sum(p, axis=-1, keepdims=True), approx=True)

    # p @ v over the full C, then keep each head's own channels and sum over heads
    o_flat = jnp.einsum('bms,bsc->bmc', p.astype(bf16), v.astype(bf16),
                        preferred_element_type=jnp.float32)            # (B, H*T, C)
    sa = jnp.sum(o_flat.reshape(B, H, T, C) * head_mask, axis=1)       # (B, T, C)

    x1 = x + sa.reshape(B * T, C)

    # ---- LayerNorm 2 ----
    mu2 = jnp.mean(x1, axis=-1, keepdims=True)
    var2 = jnp.mean((x1 - mu2) ** 2, axis=-1, keepdims=True)
    h2 = (x1 - mu2) * lax.rsqrt(var2 + LN_EPS) * ln2_g_ref[0] + ln2_b_ref[0]

    # ---- FeedForward: Linear -> ReLU -> Linear (dropout = identity) ----
    f = jnp.dot(h2.astype(bf16), w1_ref[...],
                preferred_element_type=jnp.float32) + b1_ref[0]
    f = jnp.maximum(f, 0.0)
    f = jnp.dot(f.astype(bf16), w2_ref[...],
                preferred_element_type=jnp.float32) + b2_ref[0]

    o_ref[...] = (x1 + f).reshape(B, T, C)


def block_forward(x, params):
    B, T, C = x.shape

    # per-head channel-selection mask, (H, 1, C), built once outside the kernel
    head_mask = (jnp.arange(C)[None, None, :] // HEAD_SIZE
                 == jnp.arange(N_HEAD)[:, None, None]).astype(jnp.float32)

    args = (x,
            params["ln1_g"], params["ln1_b"], params["ln2_g"], params["ln2_b"],
            head_mask, params["wqkv"],
            params["w1"], params["b1"], params["w2"], params["b2"])

    m = B * T
    flops = (2 * m * C * 3 * C                      # fused QKV
             + 2 * B * (N_HEAD * T) * C * T         # attention scores
             + 2 * B * (N_HEAD * T) * T * C         # p @ v
             + 2 * m * C * HIDDEN                   # FFN up
             + 2 * m * HIDDEN * C)                  # FFN down
    transcendentals = B * N_HEAD * T * T + 3 * m    # exp + rsqrt + reciprocal
    bytes_accessed = int(x.size * x.dtype.itemsize * 2
                         + sum(int(np.prod(a.shape)) * a.dtype.itemsize
                               for a in args[1:]))

    vmem = lambda: pl.BlockSpec(memory_space=pltpu.MemorySpace.VMEM)
    return pl.pallas_call(
        block_kernel,
        out_shape=jax.ShapeDtypeStruct((B, T, C), jnp.float32),
        in_specs=[vmem() for _ in range(len(args))],
        out_specs=vmem(),
        cost_estimate=pl.CostEstimate(flops=flops,
                                      transcendentals=transcendentals,
                                      bytes_accessed=bytes_accessed),
    )(*args)


def block_reference(x, p):
    """Pure-JAX reference of the PyTorch Block forward (eval mode), mirroring the
    kernel's mixed precision (bf16 matmul operands, f32 accumulation)."""
    bf16, f32 = jnp.bfloat16, jnp.float32
    C = NUM_EMBEDDINGS

    def ln(v, g, b):
        mu = jnp.mean(v, axis=-1, keepdims=True)
        var = jnp.mean((v - mu) ** 2, axis=-1, keepdims=True)
        return (v - mu) * lax.rsqrt(var + LN_EPS) * g[0] + b[0]

    h1 = ln(x, p["ln1_g"], p["ln1_b"])
    qkv = jnp.einsum('btc,cd->btd', h1.astype(bf16), p["wqkv"],
                     preferred_element_type=f32)
    q, k, v = qkv[..., :C], qkv[..., C:2 * C], qkv[..., 2 * C:]

    B, T, _ = x.shape
    mask = jnp.tril(jnp.ones((T, T), dtype=bool))
    outs = []
    for h in range(N_HEAD):
        lo, hi = h * HEAD_SIZE, (h + 1) * HEAD_SIZE
        wei = jnp.einsum('btd,bsd->bts', q[..., lo:hi].astype(bf16),
                         k[..., lo:hi].astype(bf16),
                         preferred_element_type=f32) * HEAD_SIZE ** -0.5
        wei = jnp.where(mask, wei, -jnp.inf)
        wei = jax.nn.softmax(wei, axis=-1)
        outs.append(jnp.einsum('bts,bsd->btd', wei.astype(bf16),
                               v[..., lo:hi].astype(bf16),
                               preferred_element_type=f32))
    x1 = x + jnp.concatenate(outs, axis=-1)

    h2 = ln(x1, p["ln2_g"], p["ln2_b"])
    f = jnp.maximum(jnp.einsum('btc,ch->bth', h2.astype(bf16), p["w1"],
                               preferred_element_type=f32) + p["b1"][0], 0.0)
    f = jnp.einsum('bth,hc->btc', f.astype(bf16), p["w2"],
                   preferred_element_type=f32) + p["b2"][0]
    return x1 + f


def init_params(key):
    ks = jax.random.split(key, 5)
    C, Hd = NUM_EMBEDDINGS, HIDDEN
    wq = jax.random.normal(ks[0], (C, C), jnp.float32) * 0.02
    wk = jax.random.normal(ks[1], (C, C), jnp.float32) * 0.02
    wv = jax.random.normal(ks[2], (C, C), jnp.float32) * 0.02
    return {
        "ln1_g": jnp.ones((1, C), jnp.float32),
        "ln1_b": jnp.zeros((1, C), jnp.float32),
        "ln2_g": jnp.ones((1, C), jnp.float32),
        "ln2_b": jnp.zeros((1, C), jnp.float32),
        # per-head Linear(C, head_size, bias=False) weights, heads concatenated
        # along the output dim, then [Wq | Wk | Wv] fused; stored bf16 (f32 acc).
        "wqkv": jnp.concatenate([wq, wk, wv], axis=1).astype(jnp.bfloat16),
        "w1": (jax.random.normal(ks[3], (C, Hd), jnp.float32) * 0.02).astype(jnp.bfloat16),
        "b1": jnp.zeros((1, Hd), jnp.float32),
        "w2": (jax.random.normal(ks[4], (Hd, C), jnp.float32) * 0.02).astype(jnp.bfloat16),
        "b2": jnp.zeros((1, C), jnp.float32),
    }


if __name__ == "__main__":
    key = jax.random.PRNGKey(0)
    kx, kp = jax.random.split(key)
    x = jax.random.normal(kx, (BATCH, SEQ, NUM_EMBEDDINGS), jnp.float32)
    params = init_params(kp)

    out = jax.block_until_ready(block_forward(x, params))
    ref = block_reference(x, params)

    # Kernel and reference use identical bf16 operand casts; remaining delta is
    # accumulation order and the approximate EUP reciprocal in the kernel softmax.
    np.testing.assert_allclose(np.asarray(out), np.asarray(ref), rtol=2e-3, atol=2e-3)

    print("KERNEL_OK")
</pallas_src>

<mosaic_0001>
module attributes {stable_mosaic.version = 11 : i64} {
  func.func @block_kernel(%arg0: memref<2x16x128xf32, #tpu.memory_space<vmem>>, %arg1: memref<1x128xf32, #tpu.memory_space<vmem>>, %arg2: memref<1x128xf32, #tpu.memory_space<vmem>>, %arg3: memref<1x128xf32, #tpu.memory_space<vmem>>, %arg4: memref<1x128xf32, #tpu.memory_space<vmem>>, %arg5: memref<4x1x128xf32, #tpu.memory_space<vmem>>, %arg6: memref<128x384xbf16, #tpu.memory_space<vmem>>, %arg7: memref<128x512xbf16, #tpu.memory_space<vmem>>, %arg8: memref<1x512xf32, #tpu.memory_space<vmem>>, %arg9: memref<512x128xbf16, #tpu.memory_space<vmem>>, %arg10: memref<1x128xf32, #tpu.memory_space<vmem>>, %arg11: memref<2x16x128xf32, #tpu.memory_space<vmem>>) attributes {dimension_semantics = [], scalar_prefetch = 0 : i64, scratch_operands = 0 : i64, tpu.core_type = #tpu.core_type<tc>} {
    %c0 = arith.constant 0 : index
    %c0_0 = arith.constant 0 : index
    %c0_1 = arith.constant 0 : index
    %0 = vector.load %arg0[%c0, %c0_0, %c0_1] : memref<2x16x128xf32, #tpu.memory_space<vmem>>, vector<2x16x128xf32>
    %1 = vector.shape_cast %0 : vector<2x16x128xf32> to vector<32x128xf32>
    %cst = arith.constant dense<0.000000e+00> : vector<32xf32>
    %2 = vector.multi_reduction <add>, %1, %cst [1] : vector<32x128xf32> to vector<32xf32>
    %3 = vector.shape_cast %2 : vector<32xf32> to vector<32x1xf32>
    %cst_2 = arith.constant 1.280000e+02 : f32
    %4 = vector.broadcast %cst_2 : f32 to vector<32x1xf32>
    %5 = arith.divf %3, %4 : vector<32x1xf32>
    %6 = vector.broadcast %5 : vector<32x1xf32> to vector<32x128xf32>
    %7 = arith.subf %1, %6 : vector<32x128xf32>
    %8 = arith.mulf %7, %7 : vector<32x128xf32>
    %cst_3 = arith.constant dense<0.000000e+00> : vector<32xf32>
    %9 = vector.multi_reduction <add>, %8, %cst_3 [1] : vector<32x128xf32> to vector<32xf32>
    %10 = vector.shape_cast %9 : vector<32xf32> to vector<32x1xf32>
    %cst_4 = arith.constant 1.280000e+02 : f32
    %11 = vector.broadcast %cst_4 : f32 to vector<32x1xf32>
    %12 = arith.divf %10, %11 : vector<32x1xf32>
    %13 = vector.broadcast %5 : vector<32x1xf32> to vector<32x128xf32>
    %14 = arith.subf %1, %13 : vector<32x128xf32>
    %cst_5 = arith.constant 9.99999974E-6 : f32
    %15 = vector.broadcast %cst_5 : f32 to vector<32x1xf32>
    %16 = arith.addf %12, %15 : vector<32x1xf32>
    %17 = math.rsqrt %16 : vector<32x1xf32>
    %18 = vector.broadcast %17 : vector<32x1xf32> to vector<32x128xf32>
    %19 = arith.mulf %14, %18 : vector<32x128xf32>
    %c0_6 = arith.constant 0 : index
    %c0_7 = arith.constant 0 : index
    %20 = vector.load %arg1[%c0_6, %c0_7] : memref<1x128xf32, #tpu.memory_space<vmem>>, vector<1x128xf32>
    %21 = vector.shape_cast %20 : vector<1x128xf32> to vector<128xf32>
    %22 = vector.shape_cast %21 : vector<128xf32> to vector<1x128xf32>
    %23 = vector.broadcast %22 : vector<1x128xf32> to vector<32x128xf32>
    %24 = arith.mulf %19, %23 : vector<32x128xf32>
    %c0_8 = arith.constant 0 : index
    %c0_9 = arith.constant 0 : index
    %25 = vector.load %arg2[%c0_8, %c0_9] : memref<1x128xf32, #tpu.memory_space<vmem>>, vector<1x128xf32>
    %26 = vector.shape_cast %25 : vector<1x128xf32> to vector<128xf32>
    %27 = vector.shape_cast %26 : vector<128xf32> to vector<1x128xf32>
    %28 = vector.broadcast %27 : vector<1x128xf32> to vector<32x128xf32>
    %29 = arith.addf %24, %28 : vector<32x128xf32>
    %30 = arith.truncf %29 : vector<32x128xf32> to vector<32x128xbf16>
    %c0_10 = arith.constant 0 : index
    %c0_11 = arith.constant 0 : index
    %31 = vector.load %arg6[%c0_10, %c0_11] : memref<128x384xbf16, #tpu.memory_space<vmem>>, vector<128x384xbf16>
    %cst_12 = arith.constant dense<0.000000e+00> : vector<32x384xf32>
    %32 = tpu.matmul %30, %31, %cst_12 {dimension_numbers = #tpu.dot_dimension_numbers<[1], [0], [0], [1], [0, 0, 1, 1], [], []>} : vector<32x128xbf16>, vector<128x384xbf16>, vector<32x384xf32> -> vector<32x384xf32>
    %33 = vector.extract_strided_slice %32 {offsets = [0, 0], sizes = [32, 128], strides = [1, 1]} : vector<32x384xf32> to vector<32x128xf32>
    %34 = vector.shape_cast %33 : vector<32x128xf32> to vector<2x16x128xf32>
    %35 = vector.extract_strided_slice %32 {offsets = [0, 128], sizes = [32, 128], strides = [1, 1]} : vector<32x384xf32> to vector<32x128xf32>
    %36 = vector.shape_cast %35 : vector<32x128xf32> to vector<2x16x128xf32>
    %37 = vector.extract_strided_slice %32 {offsets = [0, 256], sizes = [32, 128], strides = [1, 1]} : vector<32x384xf32> to vector<32x128xf32>
    %38 = vector.shape_cast %37 : vector<32x128xf32> to vector<2x16x128xf32>
    %c0_13 = arith.constant 0 : index
    %c0_14 = arith.constant 0 : index
    %c0_15 = arith.constant 0 : index
    %39 = vector.load %arg5[%c0_13, %c0_14, %c0_15] : memref<4x1x128xf32, #tpu.memory_space<vmem>>, vector<4x1x128xf32>
    %40 = vector.shape_cast %34 : vector<2x16x128xf32> to vector<2x1x16x128xf32>
    %41 = vector.shape_cast %39 : vector<4x1x128xf32> to vector<1x4x1x128xf32>
    %42 = vector.broadcast %40 : vector<2x1x16x128xf32> to vector<2x4x16x128xf32>
    %43 = vector.broadcast %41 : vector<1x4x1x128xf32> to vector<2x4x16x128xf32>
    %44 = arith.mulf %42, %43 : vector<2x4x16x128xf32>
    %45 = vector.shape_cast %44 : vector<2x4x16x128xf32> to vector<2x64x128xf32>
    %46 = arith.truncf %45 : vector<2x64x128xf32> to vector<2x64x128xbf16>
    %47 = arith.truncf %36 : vector<2x16x128xf32> to vector<2x16x128xbf16>
    "tpu.trace_start"() <{level = 10 : i32, message = "bmc,bsc->bms"}> : () -> ()
    %cst_16 = arith.constant dense<0.000000e+00> : vector<2x64x16xf32>
    %48 = tpu.matmul %46, %47, %cst_16 {dimension_numbers = #tpu.dot_dimension_numbers<[2], [2], [1], [1], [0, 0, 0, 1, 1, 1], [0], [0]>} : vector<2x64x128xbf16>, vector<2x16x128xbf16>, vector<2x64x16xf32> -> vector<2x64x16xf32>
    "tpu.trace_stop"() : () -> ()
    %cst_17 = arith.constant 0.176776692 : f32
    %49 = vector.broadcast %cst_17 : f32 to vector<2x64x16xf32>
    %50 = arith.mulf %48, %49 : vector<2x64x16xf32>
    %51 = tpu.iota {dimensions = array<i32: 0>} : vector<64x16xi32>
    %c16_i32 = arith.constant 16 : i32
    %c0_i32 = arith.constant 0 : i32
    %52 = arith.cmpi eq, %c16_i32, %c0_i32 : i32
    %c1_i32 = arith.constant 1 : i32
    %53 = arith.select %52, %c1_i32, %c16_i32 : i32
    %54 = vector.broadcast %53 : i32 to vector<64x16xi32>
    %55 = arith.remsi %51, %54 : vector<64x16xi32>
    %c0_i32_18 = arith.constant 0 : i32
    %56 = vector.broadcast %c0_i32_18 : i32 to vector<64x16xi32>
    %57 = arith.cmpi ne, %55, %56 : vector<64x16xi32>
    %c0_i32_19 = arith.constant 0 : i32
    %58 = vector.broadcast %c0_i32_19 : i32 to vector<64x16xi32>
    %59 = arith.cmpi slt, %55, %58 : vector<64x16xi32>
    %c0_i32_20 = arith.constant 0 : i32
    %60 = arith.cmpi slt, %53, %c0_i32_20 : i32
    %61 = vector.broadcast %60 : i1 to vector<64x16xi1>
    %62 = vector.broadcast %61 : vector<64x16xi1> to vector<64x16xi1>
    %63 = arith.xori %59, %62 : vector<64x16xi1>
    %64 = arith.andi %63, %57 : vector<64x16xi1>
    %65 = vector.broadcast %53 : i32 to vector<64x16xi32>
    %66 = arith.addi %55, %65 : vector<64x16xi32>
    %67 = arith.select %64, %66, %55 : vector<64x16xi1>, vector<64x16xi32>
    %68 = tpu.iota {dimensions = array<i32: 1>} : vector<64x16xi32>
    %69 = arith.cmpi sle, %68, %67 : vector<64x16xi32>
    %cst_21 = arith.constant 0xFF800000 : f32
    %70 = vector.shape_cast %69 : vector<64x16xi1> to vector<1x64x16xi1>
    %71 = vector.broadcast %70 : vector<1x64x16xi1> to vector<2x64x16xi1>
    %72 = vector.broadcast %cst_21 : f32 to vector<2x64x16xf32>
    %73 = arith.select %71, %50, %72 : vector<2x64x16xi1>, vector<2x64x16xf32>
    %cst_22 = arith.constant dense<0xFF800000> : vector<2x64xf32>
    %74 = vector.multi_reduction <maximumf>, %73, %cst_22 [2] : vector<2x64x16xf32> to vector<2x64xf32>
    %75 = vector.shape_cast %74 : vector<2x64xf32> to vector<2x64x1xf32>
    %76 = vector.broadcast %75 : vector<2x64x1xf32> to vector<2x64x16xf32>
    %77 = arith.subf %73, %76 : vector<2x64x16xf32>
    %78 = math.exp %77 : vector<2x64x16xf32>
    %cst_23 = arith.constant dense<0.000000e+00> : vector<2x64xf32>
    %79 = vector.multi_reduction <add>, %78, %cst_23 [2] : vector<2x64x16xf32> to vector<2x64xf32>
    %80 = vector.shape_cast %79 : vector<2x64xf32> to vector<2x64x1xf32>
    %81 = tpu.reciprocal %80 {approx = true} : vector<2x64x1xf32> -> vector<2x64x1xf32>
    %82 = vector.broadcast %81 : vector<2x64x1xf32> to vector<2x64x16xf32>
    %83 = arith.mulf %78, %82 : vector<2x64x16xf32>
    %84 = arith.truncf %83 : vector<2x64x16xf32> to vector<2x64x16xbf16>
    %85 = arith.truncf %38 : vector<2x16x128xf32> to vector<2x16x128xbf16>
    "tpu.trace_start"() <{level = 10 : i32, message = "bms,bsc->bmc"}> : () -> ()
    %cst_24 = arith.constant dense<0.000000e+00> : vector<2x64x128xf32>
    %86 = tpu.matmul %84, %85, %cst_24 {dimension_numbers = #tpu.dot_dimension_numbers<[2], [1], [1], [2], [0, 0, 0, 1, 1, 2], [0], [0]>} : vector<2x64x16xbf16>, vector<2x16x128xbf16>, vector<2x64x128xf32> -> vector<2x64x128xf32>
    "tpu.trace_stop"() : () -> ()
    %87 = vector.shape_cast %86 : vector<2x64x128xf32> to vector<2x4x16x128xf32>
    %88 = vector.shape_cast %39 : vector<4x1x128xf32> to vector<1x4x1x128xf32>
    %89 = vector.broadcast %88 : vector<1x4x1x128xf32> to vector<2x4x16x128xf32>
    %90 = arith.mulf %87, %89 : vector<2x4x16x128xf32>
    %cst_25 = arith.constant dense<0.000000e+00> : vector<2x16x128xf32>
    %91 = vector.multi_reduction <add>, %90, %cst_25 [1] : vector<2x4x16x128xf32> to vector<2x16x128xf32>
    %92 = vector.shape_cast %91 : vector<2x16x128xf32> to vector<32x128xf32>
    %93 = arith.addf %1, %92 : vector<32x128xf32>
    %cst_26 = arith.constant dense<0.000000e+00> : vector<32xf32>
    %94 = vector.multi_reduction <add>, %93, %cst_26 [1] : vector<32x128xf32> to vector<32xf32>
    %95 = vector.shape_cast %94 : vector<32xf32> to vector<32x1xf32>
    %cst_27 = arith.constant 1.280000e+02 : f32
    %96 = vector.broadcast %cst_27 : f32 to vector<32x1xf32>
    %97 = arith.divf %95, %96 : vector<32x1xf32>
    %98 = vector.broadcast %97 : vector<32x1xf32> to vector<32x128xf32>
    %99 = arith.subf %93, %98 : vector<32x128xf32>
    %100 = arith.mulf %99, %99 : vector<32x128xf32>
    %cst_28 = arith.constant dense<0.000000e+00> : vector<32xf32>
    %101 = vector.multi_reduction <add>, %100, %cst_28 [1] : vector<32x128xf32> to vector<32xf32>
    %102 = vector.shape_cast %101 : vector<32xf32> to vector<32x1xf32>
    %cst_29 = arith.constant 1.280000e+02 : f32
    %103 = vector.broadcast %cst_29 : f32 to vector<32x1xf32>
    %104 = arith.divf %102, %103 : vector<32x1xf32>
    %105 = vector.broadcast %97 : vector<32x1xf32> to vector<32x128xf32>
    %106 = arith.subf %93, %105 : vector<32x128xf32>
    %cst_30 = arith.constant 9.99999974E-6 : f32
    %107 = vector.broadcast %cst_30 : f32 to vector<32x1xf32>
    %108 = arith.addf %104, %107 : vector<32x1xf32>
    %109 = math.rsqrt %108 : vector<32x1xf32>
    %110 = vector.broadcast %109 : vector<32x1xf32> to vector<32x128xf32>
    %111 = arith.mulf %106, %110 : vector<32x128xf32>
    %c0_31 = arith.constant 0 : index
    %c0_32 = arith.constant 0 : index
    %112 = vector.load %arg3[%c0_31, %c0_32] : memref<1x128xf32, #tpu.memory_space<vmem>>, vector<1x128xf32>
    %113 = vector.shape_cast %112 : vector<1x128xf32> to vector<128xf32>
    %114 = vector.shape_cast %113 : vector<128xf32> to vector<1x128xf32>
    %115 = vector.broadcast %114 : vector<1x128xf32> to vector<32x128xf32>
    %116 = arith.mulf %111, %115 : vector<32x128xf32>
    %c0_33 = arith.constant 0 : index
    %c0_34 = arith.constant 0 : index
    %117 = vector.load %arg4[%c0_33, %c0_34] : memref<1x128xf32, #tpu.memory_space<vmem>>, vector<1x128xf32>
    %118 = vector.shape_cast %117 : vector<1x128xf32> to vector<128xf32>
    %119 = vector.shape_cast %118 : vector<128xf32> to vector<1x128xf32>
    %120 = vector.broadcast %119 : vector<1x128xf32> to vector<32x128xf32>
    %121 = arith.addf %116, %120 : vector<32x128xf32>
    %122 = arith.truncf %121 : vector<32x128xf32> to vector<32x128xbf16>
    %c0_35 = arith.constant 0 : index
    %c0_36 = arith.constant 0 : index
    %123 = vector.load %arg7[%c0_35, %c0_36] : memref<128x512xbf16, #tpu.memory_space<vmem>>, vector<128x512xbf16>
    %cst_37 = arith.constant dense<0.000000e+00> : vector<32x512xf32>
    %124 = tpu.matmul %122, %123, %cst_37 {dimension_numbers = #tpu.dot_dimension_numbers<[1], [0], [0], [1], [0, 0, 1, 1], [], []>} : vector<32x128xbf16>, vector<128x512xbf16>, vector<32x512xf32> -> vector<32x512xf32>
    %c0_38 = arith.constant 0 : index
    %c0_39 = arith.constant 0 : index
    %125 = vector.load %arg8[%c0_38, %c0_39] : memref<1x512xf32, #tpu.memory_space<vmem>>, vector<1x512xf32>
    %126 = vector.shape_cast %125 : vector<1x512xf32> to vector<512xf32>
    %127 = vector.shape_cast %126 : vector<512xf32> to vector<1x512xf32>
    %128 = vector.broadcast %127 : vector<1x512xf32> to vector<32x512xf32>
    %129 = arith.addf %124, %128 : vector<32x512xf32>
    %cst_40 = arith.constant 0.000000e+00 : f32
    %130 = vector.broadcast %cst_40 : f32 to vector<32x512xf32>
    %131 = arith.maximumf %129, %130 : vector<32x512xf32>
    %132 = arith.truncf %131 : vector<32x512xf32> to vector<32x512xbf16>
    %c0_41 = arith.constant 0 : index
    %c0_42 = arith.constant 0 : index
    %133 = vector.load %arg9[%c0_41, %c0_42] : memref<512x128xbf16, #tpu.memory_space<vmem>>, vector<512x128xbf16>
    %cst_43 = arith.constant dense<0.000000e+00> : vector<32x128xf32>
    %134 = tpu.matmul %132, %133, %cst_43 {dimension_numbers = #tpu.dot_dimension_numbers<[1], [0], [0], [1], [0, 0, 1, 1], [], []>} : vector<32x512xbf16>, vector<512x128xbf16>, vector<32x128xf32> -> vector<32x128xf32>
    %c0_44 = arith.constant 0 : index
    %c0_45 = arith.constant 0 : index
    %135 = vector.load %arg10[%c0_44, %c0_45] : memref<1x128xf32, #tpu.memory_space<vmem>>, vector<1x128xf32>
    %136 = vector.shape_cast %135 : vector<1x128xf32> to vector<128xf32>
    %137 = vector.shape_cast %136 : vector<128xf32> to vector<1x128xf32>
    %138 = vector.broadcast %137 : vector<1x128xf32> to vector<32x128xf32>
    %139 = arith.addf %134, %138 : vector<32x128xf32>
    %140 = arith.addf %93, %139 : vector<32x128xf32>
    %141 = vector.shape_cast %140 : vector<32x128xf32> to vector<2x16x128xf32>
    %c0_46 = arith.constant 0 : index
    %c0_47 = arith.constant 0 : index
    %c0_48 = arith.constant 0 : index
    %142 = vector.load %arg11[%c0_46, %c0_47, %c0_48] : memref<2x16x128xf32, #tpu.memory_space<vmem>>, vector<2x16x128xf32>
    tpu.vector_store %arg11[%c0_46, %c0_47, %c0_48], %141 {strides = array<i32>} : memref<2x16x128xf32, #tpu.memory_space<vmem>>, vector<2x16x128xf32>,
    return
  }
}

</mosaic_0001>

<llo_original>
// kernel: tpu_custom_call.1
$region0: #{tpu_custom_call.1}
  #allocation0 [shape = 'u32[]', space=smem, size = 0x4, offset = 0x4, fixed_abs, tag = 'smem constant byte address 0x4 - core index']
  #allocation1 [shape = 'u32[144,128]{1,0:T(1,128)}', space=vmem, size = 0x12000, scoped, tag = 'internal scratch']
  %s0 = inlined_call_operand.hbm [shape: f32[2,16,128], index: 0, kind: input, shape index: {}]
  %s1 = inlined_call_operand.vmem [shape: f32[1,128], index: 1, kind: input, shape index: {}]
  %s2 = inlined_call_operand.hbm [shape: f32[1,128], index: 2, kind: input, shape index: {}]
  %s3 = inlined_call_operand.hbm [shape: f32[1,128], index: 3, kind: input, shape index: {}]
  %s4 = inlined_call_operand.hbm [shape: f32[1,128], index: 4, kind: input, shape index: {}]
  %s5 = inlined_call_operand.vmem [shape: f32[4,1,128], index: 5, kind: input, shape index: {}]
  %s6 = inlined_call_operand.hbm [shape: bf16[128,384], index: 6, kind: input, shape index: {}]
  %s7 = inlined_call_operand.hbm [shape: bf16[128,512], index: 7, kind: input, shape index: {}]
  %s8 = inlined_call_operand.vmem [shape: f32[1,512], index: 8, kind: input, shape index: {}]
  %s9 = inlined_call_operand.hbm [shape: bf16[512,128], index: 9, kind: input, shape index: {}]
  %s10 = inlined_call_operand.vmem [shape: f32[1,128], index: 10, kind: input, shape index: {}]
  %s11 = inlined_call_operand.hbm [shape: f32[2,16,128], index: 11, kind: output, shape index: {}]
  %s12 = sld [smem:[#allocation0]]
  $region82: #{tpu_custom_call.1} parent=0
    _
  %s14 = ssub.s32 1, %s12
  %s15 = scalar_select 0, %s14, %s12
  $region1: #{tpu_custom_call.1} parent=0
    #allocation2 [shape = 'u8[16384]{0}', space=vmem, size = 0x4000, scoped, tag = 'input window, operand 0, single buffered']
    #allocation3 [shape = 's32[1]{0}', space=sflag, size = 0x4, scoped, tag = 'scoped memory for tpu_custom_call.1']
    #allocation4 [shape = 's32[1]{0}', space=sflag, size = 0x4, scoped, tag = 'scoped memory for tpu_custom_call.1']
    #allocation5 [shape = 'u8[512]{0}', space=vmem, size = 0x400, scoped, tag = 'input window, operand 2, single buffered']
    #allocation6 [shape = 's32[1]{0}', space=sflag, size = 0x4, scoped, tag = 'scoped memory for tpu_custom_call.1']
    #allocation7 [shape = 'u8[512]{0}', space=vmem, size = 0x400, scoped, tag = 'input window, operand 3, single buffered']
    #allocation8 [shape = 'u8[512]{0}', space=vmem, size = 0x400, scoped, tag = 'input window, operand 4, single buffered']
    #allocation9 [shape = 's32[1]{0}', space=sflag, size = 0x4, scoped, tag = 'scoped memory for tpu_custom_call.1']
    #allocation10 [shape = 'u8[98304]{0}', space=vmem, size = 0x18000, scoped, tag = 'input window, operand 6, single buffered']
    #allocation11 [shape = 'u8[131072]{0}', space=vmem, size = 0x20000, scoped, tag = 'input window, operand 7, single buffered']
    #allocation12 [shape = 's32[1]{0}', space=sflag, size = 0x4, scoped, tag = 'scoped memory for tpu_custom_call.1']
    #allocation13 [shape = 'u8[131072]{0}', space=vmem, size = 0x20000, scoped, tag = 'input window, operand 9, single buffered']
    #allocation14 [shape = 'u8[16384]{0}', space=vmem, size = 0x4000, scoped, tag = 'output window, operand 0, single buffered']
    %16 = vsyncpa [#allocation3], 0
    %17 = vsyncpa [#allocation6], 0
    %18 = vsyncpa [#allocation9], 0
    %19 = vsyncpa [#allocation12], 0
    %20 = vsyncpa [#allocation4], 0
    // Predicated region
    $region2: #{tpu_custom_call.1} parent=1 // pred_check
      _
    $region3: #{tpu_custom_call.1} parent=1 // pred_check_branch
      %22 = sbr.rel (0) target = $region5
    $region4: #{tpu_custom_call.1} parent=1 // pred_region
      %s24 = ssub.s32 512, 512
      %25 = vsyncadd [#allocation3], %s24
      %s26 = sshll.u32 [#allocation2], 4
      %s27 = int_to_ptr.vmem [resolvable:$true] %s26
      %32 = dma.hbm_to_vmem [thread:$0]  %s0, 512, %s27, [#allocation3], 128, 128, 8
    $region5: #{tpu_custom_call.1} parent=1 // pred_fallthru
      _
    // Predicated region
    $region6: #{tpu_custom_call.1} parent=1 // pred_check
      _
    $region7: #{tpu_custom_call.1} parent=1 // pred_check_branch
      %34 = sbr.rel (0) target = $region9
    $region8: #{tpu_custom_call.1} parent=1 // pred_region
      _
    $region9: #{tpu_custom_call.1} parent=1 // pred_fallthru
      _
    // Predicated region
    $region10: #{tpu_custom_call.1} parent=1 // pred_check
      _
    $region11: #{tpu_custom_call.1} parent=1 // pred_check_branch
      %36 = sbr.rel (0) target = $region13
    $region12: #{tpu_custom_call.1} parent=1 // pred_region
      %s38 = ssub.s32 16, 16
      %39 = vsyncadd [#allocation6], %s38
      %s41 = sshll.u32 [#allocation5], 4
      %s42 = int_to_ptr.vmem [resolvable:$true] %s41
      %44 = dma.hbm_to_vmem [thread:$0]  %s2, 16, %s42, [#allocation6]
    $region13: #{tpu_custom_call.1} parent=1 // pred_fallthru
      _
    // Predicated region
    $region14: #{tpu_custom_call.1} parent=1 // pred_check
      _
    $region15: #{tpu_custom_call.1} parent=1 // pred_check_branch
      %46 = sbr.rel (0) target = $region17
    $region16: #{tpu_custom_call.1} parent=1 // pred_region
      %s48 = ssub.s32 16, 16
      %49 = vsyncadd [#allocation6], %s48
      %s51 = sshll.u32 [#allocation7], 4
      %s52 = int_to_ptr.vmem [resolvable:$true] %s51
      %54 = dma.hbm_to_vmem [thread:$0]  %s3, 16, %s52, [#allocation6]
    $region17: #{tpu_custom_call.1} parent=1 // pred_fallthru
      _
    // Predicated region
    $region18: #{tpu_custom_call.1} parent=1 // pred_check
      _
    $region19: #{tpu_custom_call.1} parent=1 // pred_check_branch
      %56 = sbr.rel (0) target = $region21
    $region20: #{tpu_custom_call.1} parent=1 // pred_region
      %s58 = ssub.s32 16, 16
      %59 = vsyncadd [#allocation9], %s58
      %s61 = sshll.u32 [#allocation8], 4
      %s62 = int_to_ptr.vmem [resolvable:$true] %s61
      %64 = dma.hbm_to_vmem [thread:$0]  %s4, 16, %s62, [#allocation9]
    $region21: #{tpu_custom_call.1} parent=1 // pred_fallthru
      _
    // Predicated region
    $region22: #{tpu_custom_call.1} parent=1 // pred_check
      _
    $region23: #{tpu_custom_call.1} parent=1 // pred_check_branch
      %66 = sbr.rel (0) target = $region25
    $region24: #{tpu_custom_call.1} parent=1 // pred_region
      _
    $region25: #{tpu_custom_call.1} parent=1 // pred_fallthru
      _
    // Predicated region
    $region26: #{tpu_custom_call.1} parent=1 // pred_check
      _
    $region27: #{tpu_custom_call.1} parent=1 // pred_check_branch
      %68 = sbr.rel (0) target = $region29
    $region28: #{tpu_custom_call.1} parent=1 // pred_region
      %s70 = ssub.s32 3072, 3072
      %71 = vsyncadd [#allocation9], %s70
      %s72 = sshll.u32 [#allocation10], 4
      %s73 = int_to_ptr.vmem [resolvable:$true] %s72
      %78 = dma.hbm_to_vmem [thread:$0]  %s6, 3072, %s73, [#allocation9], 192, 192, 12
    $region29: #{tpu_custom_call.1} parent=1 // pred_fallthru
      _
    // Predicated region
    $region30: #{tpu_custom_call.1} parent=1 // pred_check
      _
    $region31: #{tpu_custom_call.1} parent=1 // pred_check_branch
      %80 = sbr.rel (0) target = $region33
    $region32: #{tpu_custom_call.1} parent=1 // pred_region
      %s82 = ssub.s32 4096, 4096
      %83 = vsyncadd [#allocation12], %s82
      %s84 = sshll.u32 [#allocation11], 4
      %s85 = int_to_ptr.vmem [resolvable:$true] %s84
      %90 = dma.hbm_to_vmem [thread:$0]  %s7, 4096, %s85, [#allocation12], 256, 256, 16
    $region33: #{tpu_custom_call.1} parent=1 // pred_fallthru
      _
    // Predicated region
    $region34: #{tpu_custom_call.1} parent=1 // pred_check
      _
    $region35: #{tpu_custom_call.1} parent=1 // pred_check_branch
      %92 = sbr.rel (0) target = $region37
    $region36: #{tpu_custom_call.1} parent=1 // pred_region
      _
    $region37: #{tpu_custom_call.1} parent=1 // pred_fallthru
      _
    // Predicated region
    $region38: #{tpu_custom_call.1} parent=1 // pred_check
      _
    $region39: #{tpu_custom_call.1} parent=1 // pred_check_branch
      %94 = sbr.rel (0) target = $region41
    $region40: #{tpu_custom_call.1} parent=1 // pred_region
      %s96 = ssub.s32 4096, 4096
      %97 = vsyncadd [#allocation12], %s96
      %s98 = sshll.u32 [#allocation13], 4
      %s99 = int_to_ptr.vmem [resolvable:$true] %s98
      %104 = dma.hbm_to_vmem [thread:$0]  %s9, 4096, %s99, [#allocation12], 64, 64, 4
    $region41: #{tpu_custom_call.1} parent=1 // pred_fallthru
      _
    // Predicated region
    $region42: #{tpu_custom_call.1} parent=1 // pred_check
      _
    $region43: #{tpu_custom_call.1} parent=1 // pred_check_branch
      %106 = sbr.rel (0) target = $region45
    $region44: #{tpu_custom_call.1} parent=1 // pred_region
      _
    $region45: #{tpu_custom_call.1} parent=1 // pred_fallthru
      _
    // Predicated region
    $region46: #{tpu_custom_call.1} parent=1 // pred_check
      _
    $region47: #{tpu_custom_call.1} parent=1 // pred_check_branch
      %108 = sbr.rel (0) target = $region49
    $region48: #{tpu_custom_call.1} parent=1 // pred_region
      %109 = dma.done [#allocation3], 512
    $region49: #{tpu_custom_call.1} parent=1 // pred_fallthru
      _
    // Predicated region
    $region50: #{tpu_custom_call.1} parent=1 // pred_check
      _
    $region51: #{tpu_custom_call.1} parent=1 // pred_check_branch
      %111 = sbr.rel (0) target = $region53
    $region52: #{tpu_custom_call.1} parent=1 // pred_region
      %112 = dma.done [#allocation6], 16
    $region53: #{tpu_custom_call.1} parent=1 // pred_fallthru
      _
    // Predicated region
    $region54: #{tpu_custom_call.1} parent=1 // pred_check
      _
    $region55: #{tpu_custom_call.1} parent=1 // pred_check_branch
      %114 = sbr.rel (0) target = $region57
    $region56: #{tpu_custom_call.1} parent=1 // pred_region
      %115 = dma.done [#allocation6], 16
    $region57: #{tpu_custom_call.1} parent=1 // pred_fallthru
      _
    // Predicated region
    $region58: #{tpu_custom_call.1} parent=1 // pred_check
      _
    $region59: #{tpu_custom_call.1} parent=1 // pred_check_branch
      %117 = sbr.rel (0) target = $region61
    $region60: #{tpu_custom_call.1} parent=1 // pred_region
      %118 = dma.done [#allocation9], 16
    $region61: #{tpu_custom_call.1} parent=1 // pred_fallthru
      _
    // Predicated region
    $region62: #{tpu_custom_call.1} parent=1 // pred_check
      _
    $region63: #{tpu_custom_call.1} parent=1 // pred_check_branch
      %120 = sbr.rel (0) target = $region65
    $region64: #{tpu_custom_call.1} parent=1 // pred_region
      %121 = dma.done [#allocation9], 3072
    $region65: #{tpu_custom_call.1} parent=1 // pred_fallthru
      _
    // Predicated region
    $region66: #{tpu_custom_call.1} parent=1 // pred_check
      _
    $region67: #{tpu_custom_call.1} parent=1 // pred_check_branch
      %123 = sbr.rel (0) target = $region69
    $region68: #{tpu_custom_call.1} parent=1 // pred_region
      %124 = dma.done [#allocation12], 4096
    $region69: #{tpu_custom_call.1} parent=1 // pred_fallthru
      _
    // Predicated region
    $region70: #{tpu_custom_call.1} parent=1 // pred_check
      _
    $region71: #{tpu_custom_call.1} parent=1 // pred_check_branch
      %126 = sbr.rel (0) target = $region73
    $region72: #{tpu_custom_call.1} parent=1 // pred_region
      %127 = dma.done [#allocation12], 4096
    $region73: #{tpu_custom_call.1} parent=1 // pred_fallthru
      _
    %v129 = vld [vmem:[#allocation2] sm:$0xff]
    %v130 = vld [vmem:[#allocation2 + $0x8] sm:$0xff]
    %v131 = vld [vmem:[#allocation2 + $0x10] sm:$0xff]
    %v132 = vld [vmem:[#allocation2 + $0x18] sm:$0xff]
    %133 = vadd.xlane.f32.xlu0 %v129
    %v134 = vpop.xlane.xlu0 %133
    %135 = vadd.xlane.f32.xlu0 %v130
    %v136 = vpop.xlane.xlu0 %135
    %137 = vadd.xlane.f32.xlu0 %v131
    %v138 = vpop.xlane.xlu0 %137
    %139 = vadd.xlane.f32.xlu0 %v132
    %v140 = vpop.xlane.xlu0 %139
    %v141 = vrcp.pop 128.0
    %v142 = vmul.f32 %v134, %v141
    %v143 = vmul.f32 %v136, %v141
    %v144 = vmul.f32 %v138, %v141
    %v145 = vmul.f32 %v140, %v141
    %v146 = vsub.f32 %v129, %v142
    %v147 = vsub.f32 %v130, %v143
    %v148 = vsub.f32 %v131, %v144
    %v149 = vsub.f32 %v132, %v145
    %v150 = vmul.f32 %v146, %v146
    %v151 = vmul.f32 %v147, %v147
    %v152 = vmul.f32 %v148, %v148
    %v153 = vmul.f32 %v149, %v149
    %154 = vadd.xlane.f32.xlu0 %v150
    %v155 = vpop.xlane.xlu0 %154
    %156 = vadd.xlane.f32.xlu0 %v151
    %v157 = vpop.xlane.xlu0 %156
    %158 = vadd.xlane.f32.xlu0 %v152
    %v159 = vpop.xlane.xlu0 %158
    %160 = vadd.xlane.f32.xlu0 %v153
    %v161 = vpop.xlane.xlu0 %160
    %v162 = vmul.f32 %v155, %v141
    %v163 = vmul.f32 %v157, %v141
    %v164 = vmul.f32 %v159, %v141
    %v165 = vmul.f32 %v161, %v141
    %v166 = vadd.f32 %v162, 1e-05
    %v167 = vadd.f32 %v163, 1e-05
    %v168 = vadd.f32 %v164, 1e-05
    %v169 = vadd.f32 %v165, 1e-05
    %v170 = vrsqrt.pop %v166
    %v171 = vrsqrt.pop %v167
    %v172 = vrsqrt.pop %v168
    %v173 = vrsqrt.pop %v169
    %v174 = vmul.f32 %v146, %v170
    %v175 = vmul.f32 %v147, %v171
    %v176 = vmul.f32 %v148, %v172
    %v177 = vmul.f32 %v149, %v173
    %v178 = vld [vmem:[%s1] sm:$0x1]
    %v180 = vlaneseq
    %v181 = vshrl.u32 %v180, 7
    %v182 = vsub.s32 0, %v181
    %v183 = vrot.slane %v178, %v182
    %v185 = vmul.f32 %v174, %v183
    %v186 = vmul.f32 %v175, %v183
    %v187 = vmul.f32 %v176, %v183
    %v188 = vmul.f32 %v177, %v183
    %v189 = vld [vmem:[#allocation5] sm:$0x1]
    %v191 = vlaneseq
    %v192 = vshrl.u32 %v191, 7
    %v193 = vsub.s32 0, %v192
    %v194 = vrot.slane %v189, %v193
    %v196 = vadd.f32 %v185, %v194
    %v197 = vadd.f32 %v186, %v194
    %v198 = vadd.f32 %v187, %v194
    %v199 = vadd.f32 %v188, %v194
    %v200 = vpack.c.bf16 %v197, %v196
    %v201 = vpack.c.bf16 %v199, %v198
    %v202 = vld [vmem:[#allocation10] sm:$0xff]
    %v203 = vld [vmem:[#allocation10 + $0x8] sm:$0xf]
    %v204 = vld [vmem:[#allocation10 + $0xc] sm:$0xff]
    %v205 = vld [vmem:[#allocation10 + $0x14] sm:$0xf]
    %v206 = vld [vmem:[#allocation10 + $0x18] sm:$0xff]
    %v207 = vld [vmem:[#allocation10 + $0x20] sm:$0xf]
    %v208 = vld [vmem:[#allocation10 + $0x24] sm:$0xff]
    %v209 = vld [vmem:[#allocation10 + $0x2c] sm:$0xf]
    %v210 = vld [vmem:[#allocation10 + $0x30] sm:$0xff]
    %v211 = vld [vmem:[#allocation10 + $0x38] sm:$0xf]
    %v212 = vld [vmem:[#allocation10 + $0x3c] sm:$0xff]
    %v213 = vld [vmem:[#allocation10 + $0x44] sm:$0xf]
    %v214 = vld [vmem:[#allocation10 + $0x48] sm:$0xff]
    %v215 = vld [vmem:[#allocation10 + $0x50] sm:$0xf]
    %v216 = vld [vmem:[#allocation10 + $0x54] sm:$0xff]
    %v217 = vld [vmem:[#allocation10 + $0x5c] sm:$0xf]
    %v218 = vld [vmem:[#allocation10 + $0x60] sm:$0xff]
    %v219 = vld [vmem:[#allocation10 + $0x68] sm:$0xf]
    %v220 = vld [vmem:[#allocation10 + $0x6c] sm:$0xff]
    %v221 = vld [vmem:[#allocation10 + $0x74] sm:$0xf]
    %v222 = vld [vmem:[#allocation10 + $0x78] sm:$0xff]
    %v223 = vld [vmem:[#allocation10 + $0x80] sm:$0xf]
    %v224 = vld [vmem:[#allocation10 + $0x84] sm:$0xff]
    %v225 = vld [vmem:[#allocation10 + $0x8c] sm:$0xf]
    %v226 = vld [vmem:[#allocation10 + $0x90] sm:$0xff]
    %v227 = vld [vmem:[#allocation10 + $0x98] sm:$0xf]
    %v228 = vld [vmem:[#allocation10 + $0x9c] sm:$0xff]
    %v229 = vld [vmem:[#allocation10 + $0xa4] sm:$0xf]
    %v230 = vld [vmem:[#allocation10 + $0xa8] sm:$0xff]
    %v231 = vld [vmem:[#allocation10 + $0xb0] sm:$0xf]
    %v232 = vld [vmem:[#allocation10 + $0xb4] sm:$0xff]
    %v233 = vld [vmem:[#allocation10 + $0xbc] sm:$0xf]
    %v266 = vunpack.c.l.b16 %v202
    %v267 = vunpack.c.h.b16 %v202
    %v268 = vunpack.c.l.b16 %v203
    %v269 = vunpack.c.l.b16 %v204
    %v270 = vunpack.c.h.b16 %v204
    %v271 = vunpack.c.l.b16 %v205
    %v272 = vunpack.c.l.b16 %v206
    %v273 = vunpack.c.h.b16 %v206
    %v274 = vunpack.c.l.b16 %v207
    %v275 = vunpack.c.l.b16 %v208
    %v276 = vunpack.c.h.b16 %v208
    %v277 = vunpack.c.l.b16 %v209
    %v278 = vunpack.c.l.b16 %v210
    %v279 = vunpack.c.h.b16 %v210
    %v280 = vunpack.c.l.b16 %v211
    %v281 = vunpack.c.l.b16 %v212
    %v282 = vunpack.c.h.b16 %v212
    %v283 = vunpack.c.l.b16 %v213
    %v284 = vunpack.c.l.b16 %v214
    %v285 = vunpack.c.h.b16 %v214
    %v286 = vunpack.c.l.b16 %v215
    %v287 = vunpack.c.l.b16 %v216
    %v288 = vunpack.c.h.b16 %v216
    %v289 = vunpack.c.l.b16 %v217
    %v290 = vunpack.c.l.b16 %v218
    %v291 = vunpack.c.h.b16 %v218
    %v292 = vunpack.c.l.b16 %v219
    %v293 = vunpack.c.l.b16 %v220
    %v294 = vunpack.c.h.b16 %v220
    %v295 = vunpack.c.l.b16 %v221
    %v296 = vunpack.c.l.b16 %v222
    %v297 = vunpack.c.h.b16 %v222
    %v298 = vunpack.c.l.b16 %v223
    %v299 = vunpack.c.l.b16 %v224
    %v300 = vunpack.c.h.b16 %v224
    %v301 = vunpack.c.l.b16 %v225
    %v302 = vunpack.c.l.b16 %v226
    %v303 = vunpack.c.h.b16 %v226
    %v304 = vunpack.c.l.b16 %v227
    %v305 = vunpack.c.l.b16 %v228
    %v306 = vunpack.c.h.b16 %v228
    %v307 = vunpack.c.l.b16 %v229
    %v308 = vunpack.c.l.b16 %v230
    %v309 = vunpack.c.h.b16 %v230
    %v310 = vunpack.c.l.b16 %v231
    %v311 = vunpack.c.l.b16 %v232
    %v312 = vunpack.c.h.b16 %v232
    %v313 = vunpack.c.l.b16 %v233
    %v314 = vpack.c.b16 %v269, %v266
    %v315 = vpack.c.b16 %v270, %v267
    %v316 = vpack.c.b16 %v271, %v268
    %v317 = vpack.c.b16 %v275, %v272
    %v318 = vpack.c.b16 %v276, %v273
    %v319 = vpack.c.b16 %v277, %v274
    %v320 = vpack.c.b16 %v281, %v278
    %v321 = vpack.c.b16 %v282, %v279
    %v322 = vpack.c.b16 %v283, %v280
    %v323 = vpack.c.b16 %v287, %v284
    %v324 = vpack.c.b16 %v288, %v285
    %v325 = vpack.c.b16 %v289, %v286
    %v326 = vpack.c.b16 %v293, %v290
    %v327 = vpack.c.b16 %v294, %v291
    %v328 = vpack.c.b16 %v295, %v292
    %v329 = vpack.c.b16 %v299, %v296
    %v330 = vpack.c.b16 %v300, %v297
    %v331 = vpack.c.b16 %v301, %v298
    %v332 = vpack.c.b16 %v305, %v302
    %v333 = vpack.c.b16 %v306, %v303
    %v334 = vpack.c.b16 %v307, %v304
    %v335 = vpack.c.b16 %v311, %v308
    %v336 = vpack.c.b16 %v312, %v309
    %v337 = vpack.c.b16 %v313, %v310
    %362 = vmatprep.subr.bf16.mxu0 %v336
    %363 = vmatpush1.bf16.msra.mxu0 %v335
    %364 = vmatprep.subr.bf16.mxu0 %v333
    %365 = vmatpush1.bf16.msra.mxu0 %v332
    %366 = vmatprep.subr.bf16.mxu0 %v330
    %367 = vmatpush1.bf16.msra.mxu0 %v329
    %368 = vmatprep.subr.bf16.mxu0 %v327
    %369 = vmatpush1.bf16.msra.mxu0 %v326
    %370 = vmatprep.subr.bf16.mxu0 %v324
    %371 = vmatpush1.bf16.msra.mxu0 %v323
    %372 = vmatprep.subr.bf16.mxu0 %v321
    %373 = vmatpush1.bf16.msra.mxu0 %v320
    %374 = vmatprep.subr.bf16.mxu0 %v318
    %375 = vmatpush1.bf16.msra.mxu0 %v317
    %376 = vmatprep.subr.bf16.mxu0 %v315
    %377 = vmatpush1.bf16.msra.mxu0 %v314
    %378 = vmatprep.subr.bf16.mxu0 0
    %379 = vmatpush2.bf16.msra.mxu0 0
    %380 = vmatprep.subr.bf16.mxu0 0
    %381 = vmatpush2.bf16.msra.mxu0 0
    %382 = vmatprep.subr.bf16.mxu0 0
    %383 = vmatpush2.bf16.msra.mxu0 0
    %384 = vmatprep.subr.bf16.mxu0 0
    %385 = vmatpush2.bf16.msra.mxu0 0
    %386 = vmatprep.subr.bf16.mxu0 0
    %387 = vmatpush2.bf16.msra.mxu0 0
    %388 = vmatprep.subr.bf16.mxu0 0
    %389 = vmatpush2.bf16.msra.mxu0 0
    %390 = vmatprep.subr.bf16.mxu0 0
    %391 = vmatpush2.bf16.msra.mxu0 0
    %392 = vmatprep.subr.bf16.mxu0 0
    %393 = vmatpush2.bf16.msra.mxu0 0
    %394 = vmatprep.mubr.bf16.mxu0 0
    %395 = vmatmul.mubr.bf16.gmra.mxu0 %v200
    %v396 = vpop.f32.mrf.mxu0
    %v397 = vadd.f32 0.0, %v396
    %v398 = vpop.f32.mrf.mxu0
    %v399 = vadd.f32 0.0, %v398
    %v400 = vpop.f32.mrf.mxu0
    %v401 = vadd.f32 0.0, %v400
    %v402 = vpop.f32.mrf.mxu0
    %v403 = vadd.f32 0.0, %v402
    %404 = vmatprep.mubr.bf16.mxu0 0
    %405 = vmatmul.mubr.bf16.gmra.mxu0 %v201
    %v406 = vpop.f32.mrf.mxu0
    %v407 = vadd.f32 0.0, %v406
    %v408 = vpop.f32.mrf.mxu0
    %v409 = vadd.f32 0.0, %v408
    %v410 = vpop.f32.mrf.mxu0
    %v411 = vadd.f32 0.0, %v410
    %v412 = vpop.f32.mrf.mxu0
    %v413 = vadd.f32 0.0, %v412
    %414 = vdwg.mxu0
    %415 = vmatprep.subr.bf16.mxu0 0
    %416 = vmatpush1.bf16.msra.mxu0 %v337
    %417 = vmatprep.subr.bf16.mxu0 0
    %418 = vmatpush1.bf16.msra.mxu0 %v334
    %419 = vmatprep.subr.bf16.mxu0 0
    %420 = vmatpush1.bf16.msra.mxu0 %v331
    %421 = vmatprep.subr.bf16.mxu0 0
    %422 = vmatpush1.bf16.msra.mxu0 %v328
    %423 = vmatprep.subr.bf16.mxu0 0
    %424 = vmatpush1.bf16.msra.mxu0 %v325
    %425 = vmatprep.subr.bf16.mxu0 0
    %426 = vmatpush1.bf16.msra.mxu0 %v322
    %427 = vmatprep.subr.bf16.mxu0 0
    %428 = vmatpush1.bf16.msra.mxu0 %v319
    %429 = vmatprep.subr.bf16.mxu0 0
    %430 = vmatpush1.bf16.msra.mxu0 %v316
    %431 = vmatprep.subr.bf16.mxu0 0
    %432 = vmatpush2.bf16.msra.mxu0 0
    %433 = vmatprep.subr.bf16.mxu0 0
    %434 = vmatpush2.bf16.msra.mxu0 0
    %435 = vmatprep.subr.bf16.mxu0 0
    %436 = vmatpush2.bf16.msra.mxu0 0
    %437 = vmatprep.subr.bf16.mxu0 0
    %438 = vmatpush2.bf16.msra.mxu0 0
    %439 = vmatprep.subr.bf16.mxu0 0
    %440 = vmatpush2.bf16.msra.mxu0 0
    %441 = vmatprep.subr.bf16.mxu0 0
    %442 = vmatpush2.bf16.msra.mxu0 0
    %443 = vmatprep.subr.bf16.mxu0 0
    %444 = vmatpush2.bf16.msra.mxu0 0
    %445 = vmatprep.subr.bf16.mxu0 0
    %446 = vmatpush2.bf16.msra.mxu0 0
    %447 = vmatprep.mubr.bf16.mxu0 0
    %448 = vmatmul.mubr.bf16.gmra.mxu0 %v200
    %v449 = vpop.f32.mrf.mxu0
    %v450 = vadd.f32 0.0, %v449
    %v451 = vpop.f32.mrf.mxu0
    %v452 = vpop.f32.mrf.mxu0
    %v453 = vadd.f32 0.0, %v452
    %v454 = vpop.f32.mrf.mxu0
    %455 = vmatprep.mubr.bf16.mxu0 0
    %456 = vmatmul.mubr.bf16.gmra.mxu0 %v201
    %v457 = vpop.f32.mrf.mxu0
    %v458 = vadd.f32 0.0, %v457
    %v459 = vpop.f32.mrf.mxu0
    %v460 = vpop.f32.mrf.mxu0
    %v461 = vadd.f32 0.0, %v460
    %v462 = vpop.f32.mrf.mxu0
    %463 = vdwg.mxu0
    %v464 = vld [vmem:[%s5] sm:$0x1]
    %v465 = vld [vmem:[%s5 + $0x1] sm:$0x1]
    %v466 = vld [vmem:[%s5 + $0x2] sm:$0x1]
    %v467 = vld [vmem:[%s5 + $0x3] sm:$0x1]
    %v472 = vlaneseq
    %v473 = vshrl.u32 %v472, 7
    %v474 = vsub.s32 0, %v473
    %v475 = vrot.slane %v464, %v474
    %v476 = vlaneseq
    %v477 = vshrl.u32 %v476, 7
    %v478 = vsub.s32 0, %v477
    %v479 = vrot.slane %v465, %v478
    %v480 = vlaneseq
    %v481 = vshrl.u32 %v480, 7
    %v482 = vsub.s32 0, %v481
    %v483 = vrot.slane %v466, %v482
    %v484 = vlaneseq
    %v485 = vshrl.u32 %v484, 7
    %v486 = vsub.s32 0, %v485
    %v487 = vrot.slane %v467, %v486
    %v492 = vmul.f32 %v397, %v475
    %v493 = vmul.f32 %v401, %v475
    %v494 = vmul.f32 %v397, %v479
    %v495 = vmul.f32 %v401, %v479
    %v496 = vmul.f32 %v397, %v483
    %v497 = vmul.f32 %v401, %v483
    %v498 = vmul.f32 %v397, %v487
    %v499 = vmul.f32 %v401, %v487
    %v500 = vmul.f32 %v407, %v475
    %v501 = vmul.f32 %v411, %v475
    %v502 = vmul.f32 %v407, %v479
    %v503 = vmul.f32 %v411, %v479
    %v504 = vmul.f32 %v407, %v483
    %v505 = vmul.f32 %v411, %v483
    %v506 = vmul.f32 %v407, %v487
    %v507 = vmul.f32 %v411, %v487
    %v508 = vpack.c.bf16 %v493, %v492
    %v509 = vpack.c.bf16 %v495, %v494
    %v510 = vpack.c.bf16 %v497, %v496
    %v511 = vpack.c.bf16 %v499, %v498
    %v512 = vpack.c.bf16 %v501, %v500
    %v513 = vpack.c.bf16 %v503, %v502
    %v514 = vpack.c.bf16 %v505, %v504
    %v515 = vpack.c.bf16 %v507, %v506
    %v516 = vpack.c.bf16 %v403, %v399
    %v517 = vpack.c.bf16 %v413, %v409
    %518 = vmatprep.subr.bf16.mxu0 0
    %519 = vmatpush1.bf16.xpose.msra.mxu0 0
    %520 = vmatprep.subr.bf16.mxu0 0
    %521 = vmatpush1.bf16.xpose.msra.mxu0 0
    %522 = vmatprep.subr.bf16.mxu0 0
    %523 = vmatpush1.bf16.xpose.msra.mxu0 0
    %524 = vmatprep.subr.bf16.mxu0 0
    %525 = vmatpush1.bf16.xpose.msra.mxu0 0
    %526 = vmatprep.subr.bf16.mxu0 0
    %527 = vmatpush1.bf16.xpose.msra.mxu0 0
    %528 = vmatprep.subr.bf16.mxu0 0
    %529 = vmatpush1.bf16.xpose.msra.mxu0 0
    %530 = vmatprep.subr.bf16.mxu0 0
    %531 = vmatpush1.bf16.xpose.msra.mxu0 0
    %532 = vmatprep.subr.bf16.mxu0 0
    %533 = vmatpush1.bf16.xpose.msra.mxu0 %v516
    %534 = vmatprep.subr.bf16.mxu0 0
    %535 = vmatpush2.bf16.xpose.msra.mxu0 0
    %536 = vmatprep.subr.bf16.mxu0 0
    %537 = vmatpush2.bf16.xpose.msra.mxu0 0
    %538 = vmatprep.subr.bf16.mxu0 0
    %539 = vmatpush2.bf16.xpose.msra.mxu0 0
    %540 = vmatprep.subr.bf16.mxu0 0
    %541 = vmatpush2.bf16.xpose.msra.mxu0 0
    %542 = vmatprep.subr.bf16.mxu0 0
    %543 = vmatpush2.bf16.xpose.msra.mxu0 0
    %544 = vmatprep.subr.bf16.mxu0 0
    %545 = vmatpush2.bf16.xpose.msra.mxu0 0
    %546 = vmatprep.subr.bf16.mxu0 0
    %547 = vmatpush2.bf16.xpose.msra.mxu0 0
    %548 = vmatprep.subr.bf16.mxu0 0
    %549 = vmatpush2.bf16.xpose.msra.mxu0 0
    %550 = vmatprep.mubr.bf16.mxu0 0
    %551 = vmatmul.mubr.bf16.gmra.mxu0 %v508
    %v552 = vpop.f32.mrf.mxu0
    %v553 = vadd.f32 0.0, %v552
    %v554 = vpop.f32.mrf.mxu0
    %v555 = vpop.f32.mrf.mxu0
    %v556 = vadd.f32 0.0, %v555
    %v557 = vpop.f32.mrf.mxu0
    %558 = vmatprep.mubr.bf16.mxu0 0
    %559 = vmatmul.mubr.bf16.gmra.mxu0 %v509
    %v560 = vpop.f32.mrf.mxu0
    %v561 = vadd.f32 0.0, %v560
    %v562 = vpop.f32.mrf.mxu0
    %v563 = vpop.f32.mrf.mxu0
    %v564 = vadd.f32 0.0, %v563
    %v565 = vpop.f32.mrf.mxu0
    %566 = vmatprep.mubr.bf16.mxu0 0
    %567 = vmatmul.mubr.bf16.gmra.mxu0 %v510
    %v568 = vpop.f32.mrf.mxu0
    %v569 = vadd.f32 0.0, %v568
    %v570 = vpop.f32.mrf.mxu0
    %v571 = vpop.f32.mrf.mxu0
    %v572 = vadd.f32 0.0, %v571
    %v573 = vpop.f32.mrf.mxu0
    %574 = vmatprep.mubr.bf16.mxu0 0
    %575 = vmatmul.mubr.bf16.gmra.mxu0 %v511
    %v576 = vpop.f32.mrf.mxu0
    %v577 = vadd.f32 0.0, %v576
    %v578 = vpop.f32.mrf.mxu0
    %v579 = vpop.f32.mrf.mxu0
    %v580 = vadd.f32 0.0, %v579
    %v581 = vpop.f32.mrf.mxu0
    %582 = vdwg.mxu0
    %583 = vmatprep.subr.bf16.mxu0 0
    %584 = vmatpush1.bf16.xpose.msra.mxu0 0
    %585 = vmatprep.subr.bf16.mxu0 0
    %586 = vmatpush1.bf16.xpose.msra.mxu0 0
    %587 = vmatprep.subr.bf16.mxu0 0
    %588 = vmatpush1.bf16.xpose.msra.mxu0 0
    %589 = vmatprep.subr.bf16.mxu0 0
    %590 = vmatpush1.bf16.xpose.msra.mxu0 0
    %591 = vmatprep.subr.bf16.mxu0 0
    %592 = vmatpush1.bf16.xpose.msra.mxu0 0
    %593 = vmatprep.subr.bf16.mxu0 0
    %594 = vmatpush1.bf16.xpose.msra.mxu0 0
    %595 = vmatprep.subr.bf16.mxu0 0
    %596 = vmatpush1.bf16.xpose.msra.mxu0 0
    %597 = vmatprep.subr.bf16.mxu0 0
    %598 = vmatpush1.bf16.xpose.msra.mxu0 %v517
    %599 = vmatprep.subr.bf16.mxu0 0
    %600 = vmatpush2.bf16.xpose.msra.mxu0 0
    %601 = vmatprep.subr.bf16.mxu0 0
    %602 = vmatpush2.bf16.xpose.msra.mxu0 0
    %603 = vmatprep.subr.bf16.mxu0 0
    %604 = vmatpush2.bf16.xpose.msra.mxu0 0
    %605 = vmatprep.subr.bf16.mxu0 0
    %606 = vmatpush2.bf16.xpose.msra.mxu0 0
    %607 = vmatprep.subr.bf16.mxu0 0
    %608 = vmatpush2.bf16.xpose.msra.mxu0 0
    %609 = vmatprep.subr.bf16.mxu0 0
    %610 = vmatpush2.bf16.xpose.msra.mxu0 0
    %611 = vmatprep.subr.bf16.mxu0 0
    %612 = vmatpush2.bf16.xpose.msra.mxu0 0
    %613 = vmatprep.subr.bf16.mxu0 0
    %614 = vmatpush2.bf16.xpose.msra.mxu0 0
    %615 = vmatprep.mubr.bf16.mxu0 0
    %616 = vmatmul.mubr.bf16.gmra.mxu0 %v512
    %v617 = vpop.f32.mrf.mxu0
    %v618 = vadd.f32 0.0, %v617
    %v619 = vpop.f32.mrf.mxu0
    %v620 = vpop.f32.mrf.mxu0
    %v621 = vadd.f32 0.0, %v620
    %v622 = vpop.f32.mrf.mxu0
    %623 = vmatprep.mubr.bf16.mxu0 0
    %624 = vmatmul.mubr.bf16.gmra.mxu0 %v513
    %v625 = vpop.f32.mrf.mxu0
    %v626 = vadd.f32 0.0, %v625
    %v627 = vpop.f32.mrf.mxu0
    %v628 = vpop.f32.mrf.mxu0
    %v629 = vadd.f32 0.0, %v628
    %v630 = vpop.f32.mrf.mxu0
    %631 = vmatprep.mubr.bf16.mxu0 0
    %632 = vmatmul.mubr.bf16.gmra.mxu0 %v514
    %v633 = vpop.f32.mrf.mxu0
    %v634 = vadd.f32 0.0, %v633
    %v635 = vpop.f32.mrf.mxu0
    %v636 = vpop.f32.mrf.mxu0
    %v637 = vadd.f32 0.0, %v636
    %v638 = vpop.f32.mrf.mxu0
    %639 = vmatprep.mubr.bf16.mxu0 0
    %640 = vmatmul.mubr.bf16.gmra.mxu0 %v515
    %v641 = vpop.f32.mrf.mxu0
    %v642 = vadd.f32 0.0, %v641
    %v643 = vpop.f32.mrf.mxu0
    %v644 = vpop.f32.mrf.mxu0
    %v645 = vadd.f32 0.0, %v644
    %v646 = vpop.f32.mrf.mxu0
    %647 = vdwg.mxu0
    %v648 = vmul.f32 %v553, 0.17677669
    %v649 = vmul.f32 %v556, 0.17677669
    %v650 = vmul.f32 %v561, 0.17677669
    %v651 = vmul.f32 %v564, 0.17677669
    %v652 = vmul.f32 %v569, 0.17677669
    %v653 = vmul.f32 %v572, 0.17677669
    %v654 = vmul.f32 %v577, 0.17677669
    %v655 = vmul.f32 %v580, 0.17677669
    %v656 = vmul.f32 %v618, 0.17677669
    %v657 = vmul.f32 %v621, 0.17677669
    %v658 = vmul.f32 %v626, 0.17677669
    %v659 = vmul.f32 %v629, 0.17677669
    %v660 = vmul.f32 %v634, 0.17677669
    %v661 = vmul.f32 %v637, 0.17677669
    %v662 = vmul.f32 %v642, 0.17677669
    %v663 = vmul.f32 %v645, 0.17677669
    %v664 = vlaneseq
    %v665 = vshrl.u32 %v664, 7
    %v666 = vadd.s32 %v665, 8
    %v667 = vadd.s32 %v665, 16
    %v668 = vadd.s32 %v665, 24
    %v669 = vadd.s32 %v665, 32
    %v670 = vadd.s32 %v665, 40
    %v671 = vadd.s32 %v665, 48
    %v672 = vadd.s32 %v665, 56
    %vm673 = vcmp.lt.s32.totalorder %v665, 0
    %v674 = vsub.s32 0, %v665
    %v675 = vsel %vm673, %v674, %v665
    %v676 = vshrl.u32 %v675, 4
    %v677 = vand.u32 %v675, 15
    %v678 = vsub.s32 0, %v677
    %v679 = vsel %vm673, %v678, %v677
    %vm680 = vcmp.lt.s32.totalorder %v666, 0
    %v681 = vsub.s32 0, %v666
    %v682 = vsel %vm680, %v681, %v666
    %v683 = vshrl.u32 %v682, 4
    %v684 = vand.u32 %v682, 15
    %v685 = vsub.s32 0, %v684
    %v686 = vsel %vm680, %v685, %v684
    %vm687 = vcmp.lt.s32.totalorder %v667, 0
    %v688 = vsub.s32 0, %v667
    %v689 = vsel %vm687, %v688, %v667
    %v690 = vshrl.u32 %v689, 4
    %v691 = vand.u32 %v689, 15
    %v692 = vsub.s32 0, %v691
    %v693 = vsel %vm687, %v692, %v691
    %vm694 = vcmp.lt.s32.totalorder %v668, 0
    %v695 = vsub.s32 0, %v668
    %v696 = vsel %vm694, %v695, %v668
    %v697 = vshrl.u32 %v696, 4
    %v698 = vand.u32 %v696, 15
    %v699 = vsub.s32 0, %v698
    %v700 = vsel %vm694, %v699, %v698
    %vm701 = vcmp.lt.s32.totalorder %v669, 0
    %v702 = vsub.s32 0, %v669
    %v703 = vsel %vm701, %v702, %v669
    %v704 = vshrl.u32 %v703, 4
    %v705 = vand.u32 %v703, 15
    %v706 = vsub.s32 0, %v705
    %v707 = vsel %vm701, %v706, %v705
    %vm708 = vcmp.lt.s32.totalorder %v670, 0
    %v709 = vsub.s32 0, %v670
    %v710 = vsel %vm708, %v709, %v670
    %v711 = vshrl.u32 %v710, 4
    %v712 = vand.u32 %v710, 15
    %v713 = vsub.s32 0, %v712
    %v714 = vsel %vm708, %v713, %v712
    %vm715 = vcmp.lt.s32.totalorder %v671, 0
    %v716 = vsub.s32 0, %v671
    %v717 = vsel %vm715, %v716, %v671
    %v718 = vshrl.u32 %v717, 4
    %v719 = vand.u32 %v717, 15
    %v720 = vsub.s32 0, %v719
    %v721 = vsel %vm715, %v720, %v719
    %vm722 = vcmp.lt.s32.totalorder %v672, 0
    %v723 = vsub.s32 0, %v672
    %v724 = vsel %vm722, %v723, %v672
    %v725 = vshrl.u32 %v724, 4
    %v726 = vand.u32 %v724, 15
    %v727 = vsub.s32 0, %v726
    %v728 = vsel %vm722, %v727, %v726
    %vm729 = vcmp.ne.s32.totalorder %v679, 0
    %vm730 = vcmp.ne.s32.totalorder %v686, 0
    %vm731 = vcmp.ne.s32.totalorder %v693, 0
    %vm732 = vcmp.ne.s32.totalorder %v700, 0
    %vm733 = vcmp.ne.s32.totalorder %v707, 0
    %vm734 = vcmp.ne.s32.totalorder %v714, 0
    %vm735 = vcmp.ne.s32.totalorder %v721, 0
    %vm736 = vcmp.ne.s32.totalorder %v728, 0
    %vm737 = vcmp.lt.s32.totalorder %v679, 0
    %vm738 = vcmp.lt.s32.totalorder %v686, 0
    %vm739 = vcmp.lt.s32.totalorder %v693, 0
    %vm740 = vcmp.lt.s32.totalorder %v700, 0
    %vm741 = vcmp.lt.s32.totalorder %v707, 0
    %vm742 = vcmp.lt.s32.totalorder %v714, 0
    %vm743 = vcmp.lt.s32.totalorder %v721, 0
    %vm744 = vcmp.lt.s32.totalorder %v728, 0
    %vm745 = vmand %vm737, %vm729
    %vm746 = vmand %vm738, %vm730
    %vm747 = vmand %vm739, %vm731
    %vm748 = vmand %vm740, %vm732
    %vm749 = vmand %vm741, %vm733
    %vm750 = vmand %vm742, %vm734
    %vm751 = vmand %vm743, %vm735
    %vm752 = vmand %vm744, %vm736
    %v753 = vadd.s32 %v679, 16
    %v754 = vadd.s32 %v686, 16
    %v755 = vadd.s32 %v693, 16
    %v756 = vadd.s32 %v700, 16
    %v757 = vadd.s32 %v707, 16
    %v758 = vadd.s32 %v714, 16
    %v759 = vadd.s32 %v721, 16
    %v760 = vadd.s32 %v728, 16
    %v761 = vsel %vm745, %v753, %v679
    %v762 = vsel %vm746, %v754, %v686
    %v763 = vsel %vm747, %v755, %v693
    %v764 = vsel %vm748, %v756, %v700
    %v765 = vsel %vm749, %v757, %v707
    %v766 = vsel %vm750, %v758, %v714
    %v767 = vsel %vm751, %v759, %v721
    %v768 = vsel %vm752, %v760, %v728
    %v769 = vlaneseq
    %v770 = vand.u32 %v769, 127
    %vm771 = vcmp.le.s32.totalorder %v770, %v761
    %vm772 = vcmp.le.s32.totalorder %v770, %v762
    %vm773 = vcmp.le.s32.totalorder %v770, %v763
    %vm774 = vcmp.le.s32.totalorder %v770, %v764
    %vm775 = vcmp.le.s32.totalorder %v770, %v765
    %vm776 = vcmp.le.s32.totalorder %v770, %v766
    %vm777 = vcmp.le.s32.totalorder %v770, %v767
    %vm778 = vcmp.le.s32.totalorder %v770, %v768
    %v779 = vsel %vm771, 1, 0
    %v780 = vsel %vm772, 1, 0
    %v781 = vsel %vm773, 1, 0
    %v782 = vsel %vm774, 1, 0
    %v783 = vsel %vm775, 1, 0
    %v784 = vsel %vm776, 1, 0
    %v785 = vsel %vm777, 1, 0
    %v786 = vsel %vm778, 1, 0
    %vm787 = vcmp.eq.s32.totalorder %v779, 1
    %vm788 = vcmp.eq.s32.totalorder %v780, 1
    %vm789 = vcmp.eq.s32.totalorder %v781, 1
    %vm790 = vcmp.eq.s32.totalorder %v782, 1
    %vm791 = vcmp.eq.s32.totalorder %v783, 1
    %vm792 = vcmp.eq.s32.totalorder %v784, 1
    %vm793 = vcmp.eq.s32.totalorder %v785, 1
    %vm794 = vcmp.eq.s32.totalorder %v786, 1
    %v795 = vsel %vm787, %v648, -inf
    %v796 = vsel %vm788, %v649, -inf
    %v797 = vsel %vm789, %v650, -inf
    %v798 = vsel %vm790, %v651, -inf
    %v799 = vsel %vm791, %v652, -inf
    %v800 = vsel %vm792, %v653, -inf
    %v801 = vsel %vm793, %v654, -inf
    %v802 = vsel %vm794, %v655, -inf
    %v803 = vsel %vm787, %v656, -inf
    %v804 = vsel %vm788, %v657, -inf
    %v805 = vsel %vm789, %v658, -inf
    %v806 = vsel %vm790, %v659, -inf
    %v807 = vsel %vm791, %v660, -inf
    %v808 = vsel %vm792, %v661, -inf
    %v809 = vsel %vm793, %v662, -inf
    %v810 = vsel %vm794, %v663, -inf
    %vm811 = vcmask 130048
    %v812 = vsel %vm811, %v795, -inf
    %813 = vmax.xlane.f32.xlu0 %v812
    %v814 = vpop.xlane.xlu0 %813
    %v815 = vsel %vm811, %v796, -inf
    %816 = vmax.xlane.f32.xlu0 %v815
    %v817 = vpop.xlane.xlu0 %816
    %v818 = vsel %vm811, %v797, -inf
    %819 = vmax.xlane.f32.xlu0 %v818
    %v820 = vpop.xlane.xlu0 %819
    %v821 = vsel %vm811, %v798, -inf
    %822 = vmax.xlane.f32.xlu0 %v821
    %v823 = vpop.xlane.xlu0 %822
    %v824 = vsel %vm811, %v799, -inf
    %825 = vmax.xlane.f32.xlu0 %v824
    %v826 = vpop.xlane.xlu0 %825
    %v827 = vsel %vm811, %v800, -inf
    %828 = vmax.xlane.f32.xlu0 %v827
    %v829 = vpop.xlane.xlu0 %828
    %v830 = vsel %vm811, %v801, -inf
    %831 = vmax.xlane.f32.xlu0 %v830
    %v832 = vpop.xlane.xlu0 %831
    %v833 = vsel %vm811, %v802, -inf
    %834 = vmax.xlane.f32.xlu0 %v833
    %v835 = vpop.xlane.xlu0 %834
    %v836 = vsel %vm811, %v803, -inf
    %837 = vmax.xlane.f32.xlu0 %v836
    %v838 = vpop.xlane.xlu0 %837
    %v839 = vsel %vm811, %v804, -inf
    %840 = vmax.xlane.f32.xlu0 %v839
    %v841 = vpop.xlane.xlu0 %840
    %v842 = vsel %vm811, %v805, -inf
    %843 = vmax.xlane.f32.xlu0 %v842
    %v844 = vpop.xlane.xlu0 %843
    %v845 = vsel %vm811, %v806, -inf
    %846 = vmax.xlane.f32.xlu0 %v845
    %v847 = vpop.xlane.xlu0 %846
    %v848 = vsel %vm811, %v807, -inf
    %849 = vmax.xlane.f32.xlu0 %v848
    %v850 = vpop.xlane.xlu0 %849
    %v851 = vsel %vm811, %v808, -inf
    %852 = vmax.xlane.f32.xlu0 %v851
    %v853 = vpop.xlane.xlu0 %852
    %v854 = vsel %vm811, %v809, -inf
    %855 = vmax.xlane.f32.xlu0 %v854
    %v856 = vpop.xlane.xlu0 %855
    %v857 = vsel %vm811, %v810, -inf
    %858 = vmax.xlane.f32.xlu0 %v857
    %v859 = vpop.xlane.xlu0 %858
    %v860 = vsub.f32 %v795, %v814
    %v861 = vsub.f32 %v796, %v817
    %v862 = vsub.f32 %v797, %v820
    %v863 = vsub.f32 %v798, %v823
    %v864 = vsub.f32 %v799, %v826
    %v865 = vsub.f32 %v800, %v829
    %v866 = vsub.f32 %v801, %v832
    %v867 = vsub.f32 %v802, %v835
    %v868 = vsub.f32 %v803, %v838
    %v869 = vsub.f32 %v804, %v841
    %v870 = vsub.f32 %v805, %v844
    %v871 = vsub.f32 %v806, %v847
    %v872 = vsub.f32 %v807, %v850
    %v873 = vsub.f32 %v808, %v853
    %v874 = vsub.f32 %v809, %v856
    %v875 = vsub.f32 %v810, %v859
    %v876 = vmul.f32 %v860, 1.442695
    %v877 = vpow.pop %v876
    %v878 = vmul.f32 %v861, 1.442695
    %v879 = vpow.pop %v878
    %v880 = vmul.f32 %v862, 1.442695
    %v881 = vpow.pop %v880
    %v882 = vmul.f32 %v863, 1.442695
    %v883 = vpow.pop %v882
    %v884 = vmul.f32 %v864, 1.442695
    %v885 = vpow.pop %v884
    %v886 = vmul.f32 %v865, 1.442695
    %v887 = vpow.pop %v886
    %v888 = vmul.f32 %v866, 1.442695
    %v889 = vpow.pop %v888
    %v890 = vmul.f32 %v867, 1.442695
    %v891 = vpow.pop %v890
    %v892 = vmul.f32 %v868, 1.442695
    %v893 = vpow.pop %v892
    %v894 = vmul.f32 %v869, 1.442695
    %v895 = vpow.pop %v894
    %v896 = vmul.f32 %v870, 1.442695
    %v897 = vpow.pop %v896
    %v898 = vmul.f32 %v871, 1.442695
    %v899 = vpow.pop %v898
    %v900 = vmul.f32 %v872, 1.442695
    %v901 = vpow.pop %v900
    %v902 = vmul.f32 %v873, 1.442695
    %v903 = vpow.pop %v902
    %v904 = vmul.f32 %v874, 1.442695
    %v905 = vpow.pop %v904
    %v906 = vmul.f32 %v875, 1.442695
    %v907 = vpow.pop %v906
    %v908 = vsel %vm811, %v877, 0.0
    %909 = vadd.xlane.f32.xlu0 %v908
    %v910 = vpop.xlane.xlu0 %909
    %v911 = vsel %vm811, %v879, 0.0
    %912 = vadd.xlane.f32.xlu0 %v911
    %v913 = vpop.xlane.xlu0 %912
    %v914 = vsel %vm811, %v881, 0.0
    %915 = vadd.xlane.f32.xlu0 %v914
    %v916 = vpop.xlane.xlu0 %915
    %v917 = vsel %vm811, %v883, 0.0
    %918 = vadd.xlane.f32.xlu0 %v917
    %v919 = vpop.xlane.xlu0 %918
    %v920 = vsel %vm811, %v885, 0.0
    %921 = vadd.xlane.f32.xlu0 %v920
    %v922 = vpop.xlane.xlu0 %921
    %v923 = vsel %vm811, %v887, 0.0
    %924 = vadd.xlane.f32.xlu0 %v923
    %v925 = vpop.xlane.xlu0 %924
    %v926 = vsel %vm811, %v889, 0.0
    %927 = vadd.xlane.f32.xlu0 %v926
    %v928 = vpop.xlane.xlu0 %927
    %v929 = vsel %vm811, %v891, 0.0
    %930 = vadd.xlane.f32.xlu0 %v929
    %v931 = vpop.xlane.xlu0 %930
    %v932 = vsel %vm811, %v893, 0.0
    %933 = vadd.xlane.f32.xlu0 %v932
    %v934 = vpop.xlane.xlu0 %933
    %v935 = vsel %vm811, %v895, 0.0
    %936 = vadd.xlane.f32.xlu0 %v935
    %v937 = vpop.xlane.xlu0 %936
    %v938 = vsel %vm811, %v897, 0.0
    %939 = vadd.xlane.f32.xlu0 %v938
    %v940 = vpop.xlane.xlu0 %939
    %v941 = vsel %vm811, %v899, 0.0
    %942 = vadd.xlane.f32.xlu0 %v941
    %v943 = vpop.xlane.xlu0 %942
    %v944 = vsel %vm811, %v901, 0.0
    %945 = vadd.xlane.f32.xlu0 %v944
    %v946 = vpop.xlane.xlu0 %945
    %v947 = vsel %vm811, %v903, 0.0
    %948 = vadd.xlane.f32.xlu0 %v947
    %v949 = vpop.xlane.xlu0 %948
    %v950 = vsel %vm811, %v905, 0.0
    %951 = vadd.xlane.f32.xlu0 %v950
    %v952 = vpop.xlane.xlu0 %951
    %v953 = vsel %vm811, %v907, 0.0
    %954 = vadd.xlane.f32.xlu0 %v953
    %v955 = vpop.xlane.xlu0 %954
    %v956 = vrcp.pop %v910
    %v957 = vrcp.pop %v913
    %v958 = vrcp.pop %v916
    %v959 = vrcp.pop %v919
    %v960 = vrcp.pop %v922
    %v961 = vrcp.pop %v925
    %v962 = vrcp.pop %v928
    %v963 = vrcp.pop %v931
    %v964 = vrcp.pop %v934
    %v965 = vrcp.pop %v937
    %v966 = vrcp.pop %v940
    %v967 = vrcp.pop %v943
    %v968 = vrcp.pop %v946
    %v969 = vrcp.pop %v949
    %v970 = vrcp.pop %v952
    %v971 = vrcp.pop %v955
    %v972 = vmul.f32 %v877, %v956
    %v973 = vmul.f32 %v879, %v957
    %v974 = vmul.f32 %v881, %v958
    %v975 = vmul.f32 %v883, %v959
    %v976 = vmul.f32 %v885, %v960
    %v977 = vmul.f32 %v887, %v961
    %v978 = vmul.f32 %v889, %v962
    %v979 = vmul.f32 %v891, %v963
    %v980 = vmul.f32 %v893, %v964
    %v981 = vmul.f32 %v895, %v965
    %v982 = vmul.f32 %v897, %v966
    %v983 = vmul.f32 %v899, %v967
    %v984 = vmul.f32 %v901, %v968
    %v985 = vmul.f32 %v903, %v969
    %v986 = vmul.f32 %v905, %v970
    %v987 = vmul.f32 %v907, %v971
    %v988 = vpack.c.bf16 %v973, %v972
    %v989 = vpack.c.bf16 %v975, %v974
    %v990 = vpack.c.bf16 %v977, %v976
    %v991 = vpack.c.bf16 %v979, %v978
    %v992 = vpack.c.bf16 %v981, %v980
    %v993 = vpack.c.bf16 %v983, %v982
    %v994 = vpack.c.bf16 %v985, %v984
    %v995 = vpack.c.bf16 %v987, %v986
    %v996 = vpack.c.bf16 %v453, %v450
    %v997 = vpack.c.bf16 %v461, %v458
    %v999 = vsel %vm811, %v988, 0
    %v1002 = vsel %vm811, %v989, 0
    %v1005 = vsel %vm811, %v990, 0
    %v1008 = vsel %vm811, %v991, 0
    %1010 = vmatprep.subr.bf16.mxu0 0
    %1011 = vmatpush1.bf16.msra.mxu0 0
    %1012 = vmatprep.subr.bf16.mxu0 0
    %1013 = vmatpush1.bf16.msra.mxu0 0
    %1014 = vmatprep.subr.bf16.mxu0 0
    %1015 = vmatpush1.bf16.msra.mxu0 0
    %1016 = vmatprep.subr.bf16.mxu0 0
    %1017 = vmatpush1.bf16.msra.mxu0 0
    %1018 = vmatprep.subr.bf16.mxu0 0
    %1019 = vmatpush1.bf16.msra.mxu0 0
    %1020 = vmatprep.subr.bf16.mxu0 0
    %1021 = vmatpush1.bf16.msra.mxu0 0
    %1022 = vmatprep.subr.bf16.mxu0 0
    %1023 = vmatpush1.bf16.msra.mxu0 0
    %1024 = vmatprep.subr.bf16.mxu0 0
    %1025 = vmatpush1.bf16.msra.mxu0 %v996
    %1026 = vmatprep.subr.bf16.mxu0 0
    %1027 = vmatpush2.bf16.msra.mxu0 0
    %1028 = vmatprep.subr.bf16.mxu0 0
    %1029 = vmatpush2.bf16.msra.mxu0 0
    %1030 = vmatprep.subr.bf16.mxu0 0
    %1031 = vmatpush2.bf16.msra.mxu0 0
    %1032 = vmatprep.subr.bf16.mxu0 0
    %1033 = vmatpush2.bf16.msra.mxu0 0
    %1034 = vmatprep.subr.bf16.mxu0 0
    %1035 = vmatpush2.bf16.msra.mxu0 0
    %1036 = vmatprep.subr.bf16.mxu0 0
    %1037 = vmatpush2.bf16.msra.mxu0 0
    %1038 = vmatprep.subr.bf16.mxu0 0
    %1039 = vmatpush2.bf16.msra.mxu0 0
    %1040 = vmatprep.subr.bf16.mxu0 0
    %1041 = vmatpush2.bf16.msra.mxu0 0
    %1042 = vmatprep.mubr.bf16.mxu0 0
    %1043 = vmatmul.mubr.bf16.gmra.mxu0 %v999
    %v1044 = vpop.f32.mrf.mxu0
    %v1045 = vadd.f32 0.0, %v1044
    %v1046 = vpop.f32.mrf.mxu0
    %v1047 = vpop.f32.mrf.mxu0
    %v1048 = vadd.f32 0.0, %v1047
    %v1049 = vpop.f32.mrf.mxu0
    %1050 = vmatprep.mubr.bf16.mxu0 0
    %1051 = vmatmul.mubr.bf16.gmra.mxu0 %v1002
    %v1052 = vpop.f32.mrf.mxu0
    %v1053 = vadd.f32 0.0, %v1052
    %v1054 = vpop.f32.mrf.mxu0
    %v1055 = vpop.f32.mrf.mxu0
    %v1056 = vadd.f32 0.0, %v1055
    %v1057 = vpop.f32.mrf.mxu0
    %1058 = vmatprep.mubr.bf16.mxu0 0
    %1059 = vmatmul.mubr.bf16.gmra.mxu0 %v1005
    %v1060 = vpop.f32.mrf.mxu0
    %v1061 = vadd.f32 0.0, %v1060
    %v1062 = vpop.f32.mrf.mxu0
    %v1063 = vpop.f32.mrf.mxu0
    %v1064 = vadd.f32 0.0, %v1063
    %v1065 = vpop.f32.mrf.mxu0
    %1066 = vmatprep.mubr.bf16.mxu0 0
    %1067 = vmatmul.mubr.bf16.gmra.mxu0 %v1008
    %v1068 = vpop.f32.mrf.mxu0
    %v1069 = vadd.f32 0.0, %v1068
    %v1070 = vpop.f32.mrf.mxu0
    %v1071 = vpop.f32.mrf.mxu0
    %v1072 = vadd.f32 0.0, %v1071
    %v1073 = vpop.f32.mrf.mxu0
    %1074 = vdwg.mxu0
    %v1076 = vsel %vm811, %v992, 0
    %v1079 = vsel %vm811, %v993, 0
    %v1082 = vsel %vm811, %v994, 0
    %v1085 = vsel %vm811, %v995, 0
    %1087 = vmatprep.subr.bf16.mxu0 0
    %1088 = vmatpush1.bf16.msra.mxu0 0
    %1089 = vmatprep.subr.bf16.mxu0 0
    %1090 = vmatpush1.bf16.msra.mxu0 0
    %1091 = vmatprep.subr.bf16.mxu0 0
    %1092 = vmatpush1.bf16.msra.mxu0 0
    %1093 = vmatprep.subr.bf16.mxu0 0
    %1094 = vmatpush1.bf16.msra.mxu0 0
    %1095 = vmatprep.subr.bf16.mxu0 0
    %1096 = vmatpush1.bf16.msra.mxu0 0
    %1097 = vmatprep.subr.bf16.mxu0 0
    %1098 = vmatpush1.bf16.msra.mxu0 0
    %1099 = vmatprep.subr.bf16.mxu0 0
    %1100 = vmatpush1.bf16.msra.mxu0 0
    %1101 = vmatprep.subr.bf16.mxu0 0
    %1102 = vmatpush1.bf16.msra.mxu0 %v997
    %1103 = vmatprep.subr.bf16.mxu0 0
    %1104 = vmatpush2.bf16.msra.mxu0 0
    %1105 = vmatprep.subr.bf16.mxu0 0
    %1106 = vmatpush2.bf16.msra.mxu0 0
    %1107 = vmatprep.subr.bf16.mxu0 0
    %1108 = vmatpush2.bf16.msra.mxu0 0
    %1109 = vmatprep.subr.bf16.mxu0 0
    %1110 = vmatpush2.bf16.msra.mxu0 0
    %1111 = vmatprep.subr.bf16.mxu0 0
    %1112 = vmatpush2.bf16.msra.mxu0 0
    %1113 = vmatprep.subr.bf16.mxu0 0
    %1114 = vmatpush2.bf16.msra.mxu0 0
    %1115 = vmatprep.subr.bf16.mxu0 0
    %1116 = vmatpush2.bf16.msra.mxu0 0
    %1117 = vmatprep.subr.bf16.mxu0 0
    %1118 = vmatpush2.bf16.msra.mxu0 0
    %1119 = vmatprep.mubr.bf16.mxu0 0
    %1120 = vmatmul.mubr.bf16.gmra.mxu0 %v1076
    %v1121 = vpop.f32.mrf.mxu0
    %v1122 = vadd.f32 0.0, %v1121
    %v1123 = vpop.f32.mrf.mxu0
    %v1124 = vpop.f32.mrf.mxu0
    %v1125 = vadd.f32 0.0, %v1124
    %v1126 = vpop.f32.mrf.mxu0
    %1127 = vmatprep.mubr.bf16.mxu0 0
    %1128 = vmatmul.mubr.bf16.gmra.mxu0 %v1079
    %v1129 = vpop.f32.mrf.mxu0
    %v1130 = vadd.f32 0.0, %v1129
    %v1131 = vpop.f32.mrf.mxu0
    %v1132 = vpop.f32.mrf.mxu0
    %v1133 = vadd.f32 0.0, %v1132
    %v1134 = vpop.f32.mrf.mxu0
    %1135 = vmatprep.mubr.bf16.mxu0 0
    %1136 = vmatmul.mubr.bf16.gmra.mxu0 %v1082
    %v1137 = vpop.f32.mrf.mxu0
    %v1138 = vadd.f32 0.0, %v1137
    %v1139 = vpop.f32.mrf.mxu0
    %v1140 = vpop.f32.mrf.mxu0
    %v1141 = vadd.f32 0.0, %v1140
    %v1142 = vpop.f32.mrf.mxu0
    %1143 = vmatprep.mubr.bf16.mxu0 0
    %1144 = vmatmul.mubr.bf16.gmra.mxu0 %v1085
    %v1145 = vpop.f32.mrf.mxu0
    %v1146 = vadd.f32 0.0, %v1145
    %v1147 = vpop.f32.mrf.mxu0
    %v1148 = vpop.f32.mrf.mxu0
    %v1149 = vadd.f32 0.0, %v1148
    %v1150 = vpop.f32.mrf.mxu0
    %1151 = vdwg.mxu0
    %v1152 = vmul.f32 %v1045, %v475
    %v1153 = vmul.f32 %v1048, %v475
    %v1154 = vmul.f32 %v1053, %v479
    %v1155 = vmul.f32 %v1056, %v479
    %v1156 = vmul.f32 %v1061, %v483
    %v1157 = vmul.f32 %v1064, %v483
    %v1158 = vmul.f32 %v1069, %v487
    %v1159 = vmul.f32 %v1072, %v487
    %v1160 = vmul.f32 %v1122, %v475
    %v1161 = vmul.f32 %v1125, %v475
    %v1162 = vmul.f32 %v1130, %v479
    %v1163 = vmul.f32 %v1133, %v479
    %v1164 = vmul.f32 %v1138, %v483
    %v1165 = vmul.f32 %v1141, %v483
    %v1166 = vmul.f32 %v1146, %v487
    %v1167 = vmul.f32 %v1149, %v487
    %v1168 = vadd.f32 %v1152, %v1154
    %v1169 = vadd.f32 %v1168, %v1156
    %v1170 = vadd.f32 %v1169, %v1158
    %v1171 = vadd.f32 %v1153, %v1155
    %v1172 = vadd.f32 %v1171, %v1157
    %v1173 = vadd.f32 %v1172, %v1159
    %v1174 = vadd.f32 %v1160, %v1162
    %v1175 = vadd.f32 %v1174, %v1164
    %v1176 = vadd.f32 %v1175, %v1166
    %v1177 = vadd.f32 %v1161, %v1163
    %v1178 = vadd.f32 %v1177, %v1165
    %v1179 = vadd.f32 %v1178, %v1167
    %v1180 = vadd.f32 %v129, %v1170
    %v1181 = vadd.f32 %v130, %v1173
    %v1182 = vadd.f32 %v131, %v1176
    %v1183 = vadd.f32 %v132, %v1179
    %1184 = vadd.xlane.f32.xlu0 %v1180
    %v1185 = vpop.xlane.xlu0 %1184
    %1186 = vadd.xlane.f32.xlu0 %v1181
    %v1187 = vpop.xlane.xlu0 %1186
    %1188 = vadd.xlane.f32.xlu0 %v1182
    %v1189 = vpop.xlane.xlu0 %1188
    %1190 = vadd.xlane.f32.xlu0 %v1183
    %v1191 = vpop.xlane.xlu0 %1190
    %v1192 = vmul.f32 %v1185, %v141
    %v1193 = vmul.f32 %v1187, %v141
    %v1194 = vmul.f32 %v1189, %v141
    %v1195 = vmul.f32 %v1191, %v141
    %v1196 = vsub.f32 %v1180, %v1192
    %v1197 = vsub.f32 %v1181, %v1193
    %v1198 = vsub.f32 %v1182, %v1194
    %v1199 = vsub.f32 %v1183, %v1195
    %v1200 = vmul.f32 %v1196, %v1196
    %v1201 = vmul.f32 %v1197, %v1197
    %v1202 = vmul.f32 %v1198, %v1198
    %v1203 = vmul.f32 %v1199, %v1199
    %1204 = vadd.xlane.f32.xlu0 %v1200
    %v1205 = vpop.xlane.xlu0 %1204
    %1206 = vadd.xlane.f32.xlu0 %v1201
    %v1207 = vpop.xlane.xlu0 %1206
    %1208 = vadd.xlane.f32.xlu0 %v1202
    %v1209 = vpop.xlane.xlu0 %1208
    %1210 = vadd.xlane.f32.xlu0 %v1203
    %v1211 = vpop.xlane.xlu0 %1210
    %v1212 = vmul.f32 %v1205, %v141
    %v1213 = vmul.f32 %v1207, %v141
    %v1214 = vmul.f32 %v1209, %v141
    %v1215 = vmul.f32 %v1211, %v141
    %v1216 = vadd.f32 %v1212, 1e-05
    %v1217 = vadd.f32 %v1213, 1e-05
    %v1218 = vadd.f32 %v1214, 1e-05
    %v1219 = vadd.f32 %v1215, 1e-05
    %v1220 = vrsqrt.pop %v1216
    %v1221 = vrsqrt.pop %v1217
    %v1222 = vrsqrt.pop %v1218
    %v1223 = vrsqrt.pop %v1219
    %v1224 = vmul.f32 %v1196, %v1220
    %v1225 = vmul.f32 %v1197, %v1221
    %v1226 = vmul.f32 %v1198, %v1222
    %v1227 = vmul.f32 %v1199, %v1223
    %v1228 = vld [vmem:[#allocation7] sm:$0x1]
    %v1230 = vlaneseq
    %v1231 = vshrl.u32 %v1230, 7
    %v1232 = vsub.s32 0, %v1231
    %v1233 = vrot.slane %v1228, %v1232
    %v1235 = vmul.f32 %v1224, %v1233
    %v1236 = vmul.f32 %v1225, %v1233
    %v1237 = vmul.f32 %v1226, %v1233
    %v1238 = vmul.f32 %v1227, %v1233
    %v1239 = vld [vmem:[#allocation8] sm:$0x1]
    %v1241 = vlaneseq
    %v1242 = vshrl.u32 %v1241, 7
    %v1243 = vsub.s32 0, %v1242
    %v1244 = vrot.slane %v1239, %v1243
    %v1246 = vadd.f32 %v1235, %v1244
    %v1247 = vadd.f32 %v1236, %v1244
    %v1248 = vadd.f32 %v1237, %v1244
    %v1249 = vadd.f32 %v1238, %v1244
    %v1250 = vpack.c.bf16 %v1247, %v1246
    %v1251 = vpack.c.bf16 %v1249, %v1248
    %v1252 = vld [vmem:[#allocation11] sm:$0xff]
    %v1253 = vld [vmem:[#allocation11 + $0x8] sm:$0xff]
    %v1254 = vld [vmem:[#allocation11 + $0x10] sm:$0xff]
    %v1255 = vld [vmem:[#allocation11 + $0x18] sm:$0xff]
    %v1256 = vld [vmem:[#allocation11 + $0x20] sm:$0xff]
    %v1257 = vld [vmem:[#allocation11 + $0x28] sm:$0xff]
    %v1258 = vld [vmem:[#allocation11 + $0x30] sm:$0xff]
    %v1259 = vld [vmem:[#allocation11 + $0x38] sm:$0xff]
    %v1260 = vld [vmem:[#allocation11 + $0x40] sm:$0xff]
    %v1261 = vld [vmem:[#allocation11 + $0x48] sm:$0xff]
    %v1262 = vld [vmem:[#allocation11 + $0x50] sm:$0xff]
    %v1263 = vld [vmem:[#allocation11 + $0x58] sm:$0xff]
    %v1264 = vld [vmem:[#allocation11 + $0x60] sm:$0xff]
    %v1265 = vld [vmem:[#allocation11 + $0x68] sm:$0xff]
    %v1266 = vld [vmem:[#allocation11 + $0x70] sm:$0xff]
    %v1267 = vld [vmem:[#allocation11 + $0x78] sm:$0xff]
    %v1268 = vld [vmem:[#allocation11 + $0x80] sm:$0xff]
    %v1269 = vld [vmem:[#allocation11 + $0x88] sm:$0xff]
    %v1270 = vld [vmem:[#allocation11 + $0x90] sm:$0xff]
    %v1271 = vld [vmem:[#allocation11 + $0x98] sm:$0xff]
    %v1272 = vld [vmem:[#allocation11 + $0xa0] sm:$0xff]
    %v1273 = vld [vmem:[#allocation11 + $0xa8] sm:$0xff]
    %v1274 = vld [vmem:[#allocation11 + $0xb0] sm:$0xff]
    %v1275 = vld [vmem:[#allocation11 + $0xb8] sm:$0xff]
    %v1276 = vld [vmem:[#allocation11 + $0xc0] sm:$0xff]
    %v1277 = vld [vmem:[#allocation11 + $0xc8] sm:$0xff]
    %v1278 = vld [vmem:[#allocation11 + $0xd0] sm:$0xff]
    %v1279 = vld [vmem:[#allocation11 + $0xd8] sm:$0xff]
    %v1280 = vld [vmem:[#allocation11 + $0xe0] sm:$0xff]
    %v1281 = vld [vmem:[#allocation11 + $0xe8] sm:$0xff]
    %v1282 = vld [vmem:[#allocation11 + $0xf0] sm:$0xff]
    %v1283 = vld [vmem:[#allocation11 + $0xf8] sm:$0xff]
    %v1284 = vld [vmem:[%s8] sm:$0xf]
    %v1286 = vlaneseq
    %v1287 = vshrl.u32 %v1286, 7
    %v1288 = vsub.s32 0, %v1287
    %v1289 = vrot.slane %v1284, %v1288
    %v1290 = vlaneseq
    %v1291 = vshrl.u32 %v1290, 7
    %v1292 = vsub.s32 1, %v1291
    %v1293 = vrot.slane %v1284, %v1292
    %v1294 = vlaneseq
    %v1295 = vshrl.u32 %v1294, 7
    %v1296 = vsub.s32 2, %v1295
    %v1297 = vrot.slane %v1284, %v1296
    %v1298 = vlaneseq
    %v1299 = vshrl.u32 %v1298, 7
    %v1300 = vsub.s32 3, %v1299
    %v1301 = vrot.slane %v1284, %v1300
    %v1338 = vunpack.c.l.b16 %v1252
    %v1339 = vunpack.c.h.b16 %v1252
    %v1340 = vunpack.c.l.b16 %v1253
    %v1341 = vunpack.c.h.b16 %v1253
    %v1342 = vunpack.c.l.b16 %v1254
    %v1343 = vunpack.c.h.b16 %v1254
    %v1344 = vunpack.c.l.b16 %v1255
    %v1345 = vunpack.c.h.b16 %v1255
    %v1346 = vunpack.c.l.b16 %v1256
    %v1347 = vunpack.c.h.b16 %v1256
    %v1348 = vunpack.c.l.b16 %v1257
    %v1349 = vunpack.c.h.b16 %v1257
    %v1350 = vunpack.c.l.b16 %v1258
    %v1351 = vunpack.c.h.b16 %v1258
    %v1352 = vunpack.c.l.b16 %v1259
    %v1353 = vunpack.c.h.b16 %v1259
    %v1354 = vunpack.c.l.b16 %v1260
    %v1355 = vunpack.c.h.b16 %v1260
    %v1356 = vunpack.c.l.b16 %v1261
    %v1357 = vunpack.c.h.b16 %v1261
    %v1358 = vunpack.c.l.b16 %v1262
    %v1359 = vunpack.c.h.b16 %v1262
    %v1360 = vunpack.c.l.b16 %v1263
    %v1361 = vunpack.c.h.b16 %v1263
    %v1362 = vunpack.c.l.b16 %v1264
    %v1363 = vunpack.c.h.b16 %v1264
    %v1364 = vunpack.c.l.b16 %v1265
    %v1365 = vunpack.c.h.b16 %v1265
    %v1366 = vunpack.c.l.b16 %v1266
    %v1367 = vunpack.c.h.b16 %v1266
    %v1368 = vunpack.c.l.b16 %v1267
    %v1369 = vunpack.c.h.b16 %v1267
    %v1370 = vunpack.c.l.b16 %v1268
    %v1371 = vunpack.c.h.b16 %v1268
    %v1372 = vunpack.c.l.b16 %v1269
    %v1373 = vunpack.c.h.b16 %v1269
    %v1374 = vunpack.c.l.b16 %v1270
    %v1375 = vunpack.c.h.b16 %v1270
    %v1376 = vunpack.c.l.b16 %v1271
    %v1377 = vunpack.c.h.b16 %v1271
    %v1378 = vunpack.c.l.b16 %v1272
    %v1379 = vunpack.c.h.b16 %v1272
    %v1380 = vunpack.c.l.b16 %v1273
    %v1381 = vunpack.c.h.b16 %v1273
    %v1382 = vunpack.c.l.b16 %v1274
    %v1383 = vunpack.c.h.b16 %v1274
    %v1384 = vunpack.c.l.b16 %v1275
    %v1385 = vunpack.c.h.b16 %v1275
    %v1386 = vunpack.c.l.b16 %v1276
    %v1387 = vunpack.c.h.b16 %v1276
    %v1388 = vunpack.c.l.b16 %v1277
    %v1389 = vunpack.c.h.b16 %v1277
    %v1390 = vunpack.c.l.b16 %v1278
    %v1391 = vunpack.c.h.b16 %v1278
    %v1392 = vunpack.c.l.b16 %v1279
    %v1393 = vunpack.c.h.b16 %v1279
    %v1394 = vunpack.c.l.b16 %v1280
    %v1395 = vunpack.c.h.b16 %v1280
    %v1396 = vunpack.c.l.b16 %v1281
    %v1397 = vunpack.c.h.b16 %v1281
    %v1398 = vunpack.c.l.b16 %v1282
    %v1399 = vunpack.c.h.b16 %v1282
    %v1400 = vunpack.c.l.b16 %v1283
    %v1401 = vunpack.c.h.b16 %v1283
    %v1402 = vpack.c.b16 %v1342, %v1338
    %v1403 = vpack.c.b16 %v1343, %v1339
    %v1404 = vpack.c.b16 %v1344, %v1340
    %v1405 = vpack.c.b16 %v1345, %v1341
    %v1406 = vpack.c.b16 %v1350, %v1346
    %v1407 = vpack.c.b16 %v1351, %v1347
    %v1408 = vpack.c.b16 %v1352, %v1348
    %v1409 = vpack.c.b16 %v1353, %v1349
    %v1410 = vpack.c.b16 %v1358, %v1354
    %v1411 = vpack.c.b16 %v1359, %v1355
    %v1412 = vpack.c.b16 %v1360, %v1356
    %v1413 = vpack.c.b16 %v1361, %v1357
    %v1414 = vpack.c.b16 %v1366, %v1362
    %v1415 = vpack.c.b16 %v1367, %v1363
    %v1416 = vpack.c.b16 %v1368, %v1364
    %v1417 = vpack.c.b16 %v1369, %v1365
    %v1418 = vpack.c.b16 %v1374, %v1370
    %v1419 = vpack.c.b16 %v1375, %v1371
    %v1420 = vpack.c.b16 %v1376, %v1372
    %v1421 = vpack.c.b16 %v1377, %v1373
    %v1422 = vpack.c.b16 %v1382, %v1378
    %v1423 = vpack.c.b16 %v1383, %v1379
    %v1424 = vpack.c.b16 %v1384, %v1380
    %v1425 = vpack.c.b16 %v1385, %v1381
    %v1426 = vpack.c.b16 %v1390, %v1386
    %v1427 = vpack.c.b16 %v1391, %v1387
    %v1428 = vpack.c.b16 %v1392, %v1388
    %v1429 = vpack.c.b16 %v1393, %v1389
    %v1430 = vpack.c.b16 %v1398, %v1394
    %v1431 = vpack.c.b16 %v1399, %v1395
    %v1432 = vpack.c.b16 %v1400, %v1396
    %v1433 = vpack.c.b16 %v1401, %v1397
    %1466 = vmatprep.subr.bf16.mxu0 %v1431
    %1467 = vmatpush1.bf16.msra.mxu0 %v1430
    %1468 = vmatprep.subr.bf16.mxu0 %v1427
    %1469 = vmatpush1.bf16.msra.mxu0 %v1426
    %1470 = vmatprep.subr.bf16.mxu0 %v1423
    %1471 = vmatpush1.bf16.msra.mxu0 %v1422
    %1472 = vmatprep.subr.bf16.mxu0 %v1419
    %1473 = vmatpush1.bf16.msra.mxu0 %v1418
    %1474 = vmatprep.subr.bf16.mxu0 %v1415
    %1475 = vmatpush1.bf16.msra.mxu0 %v1414
    %1476 = vmatprep.subr.bf16.mxu0 %v1411
    %1477 = vmatpush1.bf16.msra.mxu0 %v1410
    %1478 = vmatprep.subr.bf16.mxu0 %v1407
    %1479 = vmatpush1.bf16.msra.mxu0 %v1406
    %1480 = vmatprep.subr.bf16.mxu0 %v1403
    %1481 = vmatpush1.bf16.msra.mxu0 %v1402
    %1482 = vmatprep.subr.bf16.mxu0 0
    %1483 = vmatpush2.bf16.msra.mxu0 0
    %1484 = vmatprep.subr.bf16.mxu0 0
    %1485 = vmatpush2.bf16.msra.mxu0 0
    %1486 = vmatprep.subr.bf16.mxu0 0
    %1487 = vmatpush2.bf16.msra.mxu0 0
    %1488 = vmatprep.subr.bf16.mxu0 0
    %1489 = vmatpush2.bf16.msra.mxu0 0
    %1490 = vmatprep.subr.bf16.mxu0 0
    %1491 = vmatpush2.bf16.msra.mxu0 0
    %1492 = vmatprep.subr.bf16.mxu0 0
    %1493 = vmatpush2.bf16.msra.mxu0 0
    %1494 = vmatprep.subr.bf16.mxu0 0
    %1495 = vmatpush2.bf16.msra.mxu0 0
    %1496 = vmatprep.subr.bf16.mxu0 0
    %1497 = vmatpush2.bf16.msra.mxu0 0
    %1498 = vmatprep.mubr.bf16.mxu0 0
    %1499 = vmatmul.mubr.bf16.gmra.mxu0 %v1250
    %v1500 = vpop.f32.mrf.mxu0
    %v1501 = vadd.f32 %v1289, %v1500
    %v1502 = vpop.f32.mrf.mxu0
    %v1503 = vadd.f32 %v1293, %v1502
    %v1504 = vpop.f32.mrf.mxu0
    %v1505 = vadd.f32 %v1289, %v1504
    %v1506 = vpop.f32.mrf.mxu0
    %v1507 = vadd.f32 %v1293, %v1506
    %1508 = vmatprep.mubr.bf16.mxu0 0
    %1509 = vmatmul.mubr.bf16.gmra.mxu0 %v1251
    %v1510 = vpop.f32.mrf.mxu0
    %v1511 = vadd.f32 %v1289, %v1510
    %v1512 = vpop.f32.mrf.mxu0
    %v1513 = vadd.f32 %v1293, %v1512
    %v1514 = vpop.f32.mrf.mxu0
    %v1515 = vadd.f32 %v1289, %v1514
    %v1516 = vpop.f32.mrf.mxu0
    %v1517 = vadd.f32 %v1293, %v1516
    %1518 = vdwg.mxu0
    %1519 = vmatprep.subr.bf16.mxu0 %v1433
    %1520 = vmatpush1.bf16.msra.mxu0 %v1432
    %1521 = vmatprep.subr.bf16.mxu0 %v1429
    %1522 = vmatpush1.bf16.msra.mxu0 %v1428
    %1523 = vmatprep.subr.bf16.mxu0 %v1425
    %1524 = vmatpush1.bf16.msra.mxu0 %v1424
    %1525 = vmatprep.subr.bf16.mxu0 %v1421
    %1526 = vmatpush1.bf16.msra.mxu0 %v1420
    %1527 = vmatprep.subr.bf16.mxu0 %v1417
    %1528 = vmatpush1.bf16.msra.mxu0 %v1416
    %1529 = vmatprep.subr.bf16.mxu0 %v1413
    %1530 = vmatpush1.bf16.msra.mxu0 %v1412
    %1531 = vmatprep.subr.bf16.mxu0 %v1409
    %1532 = vmatpush1.bf16.msra.mxu0 %v1408
    %1533 = vmatprep.subr.bf16.mxu0 %v1405
    %1534 = vmatpush1.bf16.msra.mxu0 %v1404
    %1535 = vmatprep.subr.bf16.mxu0 0
    %1536 = vmatpush2.bf16.msra.mxu0 0
    %1537 = vmatprep.subr.bf16.mxu0 0
    %1538 = vmatpush2.bf16.msra.mxu0 0
    %1539 = vmatprep.subr.bf16.mxu0 0
    %1540 = vmatpush2.bf16.msra.mxu0 0
    %1541 = vmatprep.subr.bf16.mxu0 0
    %1542 = vmatpush2.bf16.msra.mxu0 0
    %1543 = vmatprep.subr.bf16.mxu0 0
    %1544 = vmatpush2.bf16.msra.mxu0 0
    %1545 = vmatprep.subr.bf16.mxu0 0
    %1546 = vmatpush2.bf16.msra.mxu0 0
    %1547 = vmatprep.subr.bf16.mxu0 0
    %1548 = vmatpush2.bf16.msra.mxu0 0
    %1549 = vmatprep.subr.bf16.mxu0 0
    %1550 = vmatpush2.bf16.msra.mxu0 0
    %1551 = vmatprep.mubr.bf16.mxu0 0
    %1552 = vmatmul.mubr.bf16.gmra.mxu0 %v1250
    %v1553 = vpop.f32.mrf.mxu0
    %v1554 = vadd.f32 %v1297, %v1553
    %v1555 = vpop.f32.mrf.mxu0
    %v1556 = vadd.f32 %v1301, %v1555
    %v1557 = vpop.f32.mrf.mxu0
    %v1558 = vadd.f32 %v1297, %v1557
    %v1559 = vpop.f32.mrf.mxu0
    %v1560 = vadd.f32 %v1301, %v1559
    %1561 = vmatprep.mubr.bf16.mxu0 0
    %1562 = vmatmul.mubr.bf16.gmra.mxu0 %v1251
    %v1563 = vpop.f32.mrf.mxu0
    %v1564 = vadd.f32 %v1297, %v1563
    %v1565 = vpop.f32.mrf.mxu0
    %v1566 = vadd.f32 %v1301, %v1565
    %v1567 = vpop.f32.mrf.mxu0
    %v1568 = vadd.f32 %v1297, %v1567
    %v1569 = vpop.f32.mrf.mxu0
    %v1570 = vadd.f32 %v1301, %v1569
    %1571 = vdwg.mxu0
    %v1572 = vmax.f32 %v1501, 0.0
    %v1573 = vmax.f32 %v1503, 0.0
    %v1574 = vmax.f32 %v1554, 0.0
    %v1575 = vmax.f32 %v1556, 0.0
    %v1576 = vmax.f32 %v1505, 0.0
    %v1577 = vmax.f32 %v1507, 0.0
    %v1578 = vmax.f32 %v1558, 0.0
    %v1579 = vmax.f32 %v1560, 0.0
    %v1580 = vmax.f32 %v1511, 0.0
    %v1581 = vmax.f32 %v1513, 0.0
    %v1582 = vmax.f32 %v1564, 0.0
    %v1583 = vmax.f32 %v1566, 0.0
    %v1584 = vmax.f32 %v1515, 0.0
    %v1585 = vmax.f32 %v1517, 0.0
    %v1586 = vmax.f32 %v1568, 0.0
    %v1587 = vmax.f32 %v1570, 0.0
    %v1588 = vpack.c.bf16 %v1576, %v1572
    %v1589 = vpack.c.bf16 %v1577, %v1573
    %v1590 = vpack.c.bf16 %v1578, %v1574
    %v1591 = vpack.c.bf16 %v1579, %v1575
    %v1592 = vpack.c.bf16 %v1584, %v1580
    %v1593 = vpack.c.bf16 %v1585, %v1581
    %v1594 = vpack.c.bf16 %v1586, %v1582
    %v1595 = vpack.c.bf16 %v1587, %v1583
    %v1596 = vld [vmem:[#allocation13] sm:$0xf]
    %v1597 = vld [vmem:[#allocation13 + $0x4] sm:$0xf]
    %v1598 = vld [vmem:[#allocation13 + $0x8] sm:$0xf]
    %v1599 = vld [vmem:[#allocation13 + $0xc] sm:$0xf]
    %v1600 = vld [vmem:[#allocation13 + $0x10] sm:$0xf]
    %v1601 = vld [vmem:[#allocation13 + $0x14] sm:$0xf]
    %v1602 = vld [vmem:[#allocation13 + $0x18] sm:$0xf]
    %v1603 = vld [vmem:[#allocation13 + $0x1c] sm:$0xf]
    %v1604 = vld [vmem:[#allocation13 + $0x20] sm:$0xf]
    %v1605 = vld [vmem:[#allocation13 + $0x24] sm:$0xf]
    %v1606 = vld [vmem:[#allocation13 + $0x28] sm:$0xf]
    %v1607 = vld [vmem:[#allocation13 + $0x2c] sm:$0xf]
    %v1608 = vld [vmem:[#allocation13 + $0x30] sm:$0xf]
    %v1609 = vld [vmem:[#allocation13 + $0x34] sm:$0xf]
    %v1610 = vld [vmem:[#allocation13 + $0x38] sm:$0xf]
    %v1611 = vld [vmem:[#allocation13 + $0x3c] sm:$0xf]
    %v1612 = vld [vmem:[#allocation13 + $0x40] sm:$0xf]
    %v1613 = vld [vmem:[#allocation13 + $0x44] sm:$0xf]
    %v1614 = vld [vmem:[#allocation13 + $0x48] sm:$0xf]
    %v1615 = vld [vmem:[#allocation13 + $0x4c] sm:$0xf]
    %v1616 = vld [vmem:[#allocation13 + $0x50] sm:$0xf]
    %v1617 = vld [vmem:[#allocation13 + $0x54] sm:$0xf]
    %v1618 = vld [vmem:[#allocation13 + $0x58] sm:$0xf]
    %v1619 = vld [vmem:[#allocation13 + $0x5c] sm:$0xf]
    %v1620 = vld [vmem:[#allocation13 + $0x60] sm:$0xf]
    %v1621 = vld [vmem:[#allocation13 + $0x64] sm:$0xf]
    %v1622 = vld [vmem:[#allocation13 + $0x68] sm:$0xf]
    %v1623 = vld [vmem:[#allocation13 + $0x6c] sm:$0xf]
    %v1624 = vld [vmem:[#allocation13 + $0x70] sm:$0xf]
    %v1625 = vld [vmem:[#allocation13 + $0x74] sm:$0xf]
    %v1626 = vld [vmem:[#allocation13 + $0x78] sm:$0xf]
    %v1627 = vld [vmem:[#allocation13 + $0x7c] sm:$0xf]
    %v1628 = vld [vmem:[#allocation13 + $0x80] sm:$0xf]
    %v1629 = vld [vmem:[#allocation13 + $0x84] sm:$0xf]
    %v1630 = vld [vmem:[#allocation13 + $0x88] sm:$0xf]
    %v1631 = vld [vmem:[#allocation13 + $0x8c] sm:$0xf]
    %v1632 = vld [vmem:[#allocation13 + $0x90] sm:$0xf]
    %v1633 = vld [vmem:[#allocation13 + $0x94] sm:$0xf]
    %v1634 = vld [vmem:[#allocation13 + $0x98] sm:$0xf]
    %v1635 = vld [vmem:[#allocation13 + $0x9c] sm:$0xf]
    %v1636 = vld [vmem:[#allocation13 + $0xa0] sm:$0xf]
    %v1637 = vld [vmem:[#allocation13 + $0xa4] sm:$0xf]
    %v1638 = vld [vmem:[#allocation13 + $0xa8] sm:$0xf]
    %v1639 = vld [vmem:[#allocation13 + $0xac] sm:$0xf]
    %v1640 = vld [vmem:[#allocation13 + $0xb0] sm:$0xf]
    %v1641 = vld [vmem:[#allocation13 + $0xb4] sm:$0xf]
    %v1642 = vld [vmem:[#allocation13 + $0xb8] sm:$0xf]
    %v1643 = vld [vmem:[#allocation13 + $0xbc] sm:$0xf]
    %v1644 = vld [vmem:[#allocation13 + $0xc0] sm:$0xf]
    %v1645 = vld [vmem:[#allocation13 + $0xc4] sm:$0xf]
    %v1646 = vld [vmem:[#allocation13 + $0xc8] sm:$0xf]
    %v1647 = vld [vmem:[#allocation13 + $0xcc] sm:$0xf]
    %v1648 = vld [vmem:[#allocation13 + $0xd0] sm:$0xf]
    %v1649 = vld [vmem:[#allocation13 + $0xd4] sm:$0xf]
    %v1650 = vld [vmem:[#allocation13 + $0xd8] sm:$0xf]
    %v1651 = vld [vmem:[#allocation13 + $0xdc] sm:$0xf]
    %v1652 = vld [vmem:[#allocation13 + $0xe0] sm:$0xf]
    %v1653 = vld [vmem:[#allocation13 + $0xe4] sm:$0xf]
    %v1654 = vld [vmem:[#allocation13 + $0xe8] sm:$0xf]
    %v1655 = vld [vmem:[#allocation13 + $0xec] sm:$0xf]
    %v1656 = vld [vmem:[#allocation13 + $0xf0] sm:$0xf]
    %v1657 = vld [vmem:[#allocation13 + $0xf4] sm:$0xf]
    %v1658 = vld [vmem:[#allocation13 + $0xf8] sm:$0xf]
    %v1659 = vld [vmem:[#allocation13 + $0xfc] sm:$0xf]
    %v1660 = vld [vmem:[%s10] sm:$0x1]
    %v1662 = vlaneseq
    %v1663 = vshrl.u32 %v1662, 7
    %v1664 = vsub.s32 0, %v1663
    %v1665 = vrot.slane %v1660, %v1664
    %v1731 = vunpack.c.l.b16 %v1596
    %v1732 = vunpack.c.l.b16 %v1597
    %v1733 = vunpack.c.l.b16 %v1598
    %v1734 = vunpack.c.l.b16 %v1599
    %v1735 = vunpack.c.l.b16 %v1600
    %v1736 = vunpack.c.l.b16 %v1601
    %v1737 = vunpack.c.l.b16 %v1602
    %v1738 = vunpack.c.l.b16 %v1603
    %v1739 = vunpack.c.l.b16 %v1604
    %v1740 = vunpack.c.l.b16 %v1605
    %v1741 = vunpack.c.l.b16 %v1606
    %v1742 = vunpack.c.l.b16 %v1607
    %v1743 = vunpack.c.l.b16 %v1608
    %v1744 = vunpack.c.l.b16 %v1609
    %v1745 = vunpack.c.l.b16 %v1610
    %v1746 = vunpack.c.l.b16 %v1611
    %v1747 = vunpack.c.l.b16 %v1612
    %v1748 = vunpack.c.l.b16 %v1613
    %v1749 = vunpack.c.l.b16 %v1614
    %v1750 = vunpack.c.l.b16 %v1615
    %v1751 = vunpack.c.l.b16 %v1616
    %v1752 = vunpack.c.l.b16 %v1617
    %v1753 = vunpack.c.l.b16 %v1618
    %v1754 = vunpack.c.l.b16 %v1619
    %v1755 = vunpack.c.l.b16 %v1620
    %v1756 = vunpack.c.l.b16 %v1621
    %v1757 = vunpack.c.l.b16 %v1622
    %v1758 = vunpack.c.l.b16 %v1623
    %v1759 = vunpack.c.l.b16 %v1624
    %v1760 = vunpack.c.l.b16 %v1625
    %v1761 = vunpack.c.l.b16 %v1626
    %v1762 = vunpack.c.l.b16 %v1627
    %v1763 = vunpack.c.l.b16 %v1628
    %v1764 = vunpack.c.l.b16 %v1629
    %v1765 = vunpack.c.l.b16 %v1630
    %v1766 = vunpack.c.l.b16 %v1631
    %v1767 = vunpack.c.l.b16 %v1632
    %v1768 = vunpack.c.l.b16 %v1633
    %v1769 = vunpack.c.l.b16 %v1634
    %v1770 = vunpack.c.l.b16 %v1635
    %v1771 = vunpack.c.l.b16 %v1636
    %v1772 = vunpack.c.l.b16 %v1637
    %v1773 = vunpack.c.l.b16 %v1638
    %v1774 = vunpack.c.l.b16 %v1639
    %v1775 = vunpack.c.l.b16 %v1640
    %v1776 = vunpack.c.l.b16 %v1641
    %v1777 = vunpack.c.l.b16 %v1642
    %v1778 = vunpack.c.l.b16 %v1643
    %v1779 = vunpack.c.l.b16 %v1644
    %v1780 = vunpack.c.l.b16 %v1645
    %v1781 = vunpack.c.l.b16 %v1646
    %v1782 = vunpack.c.l.b16 %v1647
    %v1783 = vunpack.c.l.b16 %v1648
    %v1784 = vunpack.c.l.b16 %v1649
    %v1785 = vunpack.c.l.b16 %v1650
    %v1786 = vunpack.c.l.b16 %v1651
    %v1787 = vunpack.c.l.b16 %v1652
    %v1788 = vunpack.c.l.b16 %v1653
    %v1789 = vunpack.c.l.b16 %v1654
    %v1790 = vunpack.c.l.b16 %v1655
    %v1791 = vunpack.c.l.b16 %v1656
    %v1792 = vunpack.c.l.b16 %v1657
    %v1793 = vunpack.c.l.b16 %v1658
    %v1794 = vunpack.c.l.b16 %v1659
    %v1795 = vpack.c.b16 %v1732, %v1731
    %v1796 = vpack.c.b16 %v1734, %v1733
    %v1797 = vpack.c.b16 %v1736, %v1735
    %v1798 = vpack.c.b16 %v1738, %v1737
    %v1799 = vpack.c.b16 %v1740, %v1739
    %v1800 = vpack.c.b16 %v1742, %v1741
    %v1801 = vpack.c.b16 %v1744, %v1743
    %v1802 = vpack.c.b16 %v1746, %v1745
    %v1803 = vpack.c.b16 %v1748, %v1747
    %v1804 = vpack.c.b16 %v1750, %v1749
    %v1805 = vpack.c.b16 %v1752, %v1751
    %v1806 = vpack.c.b16 %v1754, %v1753
    %v1807 = vpack.c.b16 %v1756, %v1755
    %v1808 = vpack.c.b16 %v1758, %v1757
    %v1809 = vpack.c.b16 %v1760, %v1759
    %v1810 = vpack.c.b16 %v1762, %v1761
    %v1811 = vpack.c.b16 %v1764, %v1763
    %v1812 = vpack.c.b16 %v1766, %v1765
    %v1813 = vpack.c.b16 %v1768, %v1767
    %v1814 = vpack.c.b16 %v1770, %v1769
    %v1815 = vpack.c.b16 %v1772, %v1771
    %v1816 = vpack.c.b16 %v1774, %v1773
    %v1817 = vpack.c.b16 %v1776, %v1775
    %v1818 = vpack.c.b16 %v1778, %v1777
    %v1819 = vpack.c.b16 %v1780, %v1779
    %v1820 = vpack.c.b16 %v1782, %v1781
    %v1821 = vpack.c.b16 %v1784, %v1783
    %v1822 = vpack.c.b16 %v1786, %v1785
    %v1823 = vpack.c.b16 %v1788, %v1787
    %v1824 = vpack.c.b16 %v1790, %v1789
    %v1825 = vpack.c.b16 %v1792, %v1791
    %v1826 = vpack.c.b16 %v1794, %v1793
    %1859 = vmatprep.subr.bf16.mxu0 0
    %1860 = vmatpush1.bf16.msra.mxu0 %v1802
    %1861 = vmatprep.subr.bf16.mxu0 0
    %1862 = vmatpush1.bf16.msra.mxu0 %v1801
    %1863 = vmatprep.subr.bf16.mxu0 0
    %1864 = vmatpush1.bf16.msra.mxu0 %v1800
    %1865 = vmatprep.subr.bf16.mxu0 0
    %1866 = vmatpush1.bf16.msra.mxu0 %v1799
    %1867 = vmatprep.subr.bf16.mxu0 0
    %1868 = vmatpush1.bf16.msra.mxu0 %v1798
    %1869 = vmatprep.subr.bf16.mxu0 0
    %1870 = vmatpush1.bf16.msra.mxu0 %v1797
    %1871 = vmatprep.subr.bf16.mxu0 0
    %1872 = vmatpush1.bf16.msra.mxu0 %v1796
    %1873 = vmatprep.subr.bf16.mxu0 0
    %1874 = vmatpush1.bf16.msra.mxu0 %v1795
    %1875 = vmatprep.subr.bf16.mxu0 0
    %1876 = vmatpush2.bf16.msra.mxu0 %v1810
    %1877 = vmatprep.subr.bf16.mxu0 0
    %1878 = vmatpush2.bf16.msra.mxu0 %v1809
    %1879 = vmatprep.subr.bf16.mxu0 0
    %1880 = vmatpush2.bf16.msra.mxu0 %v1808
    %1881 = vmatprep.subr.bf16.mxu0 0
    %1882 = vmatpush2.bf16.msra.mxu0 %v1807
    %1883 = vmatprep.subr.bf16.mxu0 0
    %1884 = vmatpush2.bf16.msra.mxu0 %v1806
    %1885 = vmatprep.subr.bf16.mxu0 0
    %1886 = vmatpush2.bf16.msra.mxu0 %v1805
    %1887 = vmatprep.subr.bf16.mxu0 0
    %1888 = vmatpush2.bf16.msra.mxu0 %v1804
    %1889 = vmatprep.subr.bf16.mxu0 0
    %1890 = vmatpush2.bf16.msra.mxu0 %v1803
    %1891 = vmatprep.mubr.bf16.mxu0 %v1589
    %1892 = vmatmul.mubr.bf16.gmra.mxu0 %v1588
    %v1893 = vpop.f32.mrf.mxu0
    %v1894 = vadd.f32 %v1665, %v1893
    %v1895 = vpop.f32.mrf.mxu0
    %v1896 = vpop.f32.mrf.mxu0
    %v1897 = vadd.f32 %v1665, %v1896
    %v1898 = vpop.f32.mrf.mxu0
    %1899 = vmatprep.mubr.bf16.mxu0 %v1593
    %1900 = vmatmul.mubr.bf16.gmra.mxu0 %v1592
    %v1901 = vpop.f32.mrf.mxu0
    %v1902 = vadd.f32 %v1665, %v1901
    %v1903 = vpop.f32.mrf.mxu0
    %v1904 = vpop.f32.mrf.mxu0
    %v1905 = vadd.f32 %v1665, %v1904
    %v1906 = vpop.f32.mrf.mxu0
    %1907 = vdwg.mxu0
    %1908 = vmatprep.subr.bf16.mxu0 0
    %1909 = vmatpush1.bf16.msra.mxu0 %v1818
    %1910 = vmatprep.subr.bf16.mxu0 0
    %1911 = vmatpush1.bf16.msra.mxu0 %v1817
    %1912 = vmatprep.subr.bf16.mxu0 0
    %1913 = vmatpush1.bf16.msra.mxu0 %v1816
    %1914 = vmatprep.subr.bf16.mxu0 0
    %1915 = vmatpush1.bf16.msra.mxu0 %v1815
    %1916 = vmatprep.subr.bf16.mxu0 0
    %1917 = vmatpush1.bf16.msra.mxu0 %v1814
    %1918 = vmatprep.subr.bf16.mxu0 0
    %1919 = vmatpush1.bf16.msra.mxu0 %v1813
    %1920 = vmatprep.subr.bf16.mxu0 0
    %1921 = vmatpush1.bf16.msra.mxu0 %v1812
    %1922 = vmatprep.subr.bf16.mxu0 0
    %1923 = vmatpush1.bf16.msra.mxu0 %v1811
    %1924 = vmatprep.subr.bf16.mxu0 0
    %1925 = vmatpush2.bf16.msra.mxu0 %v1826
    %1926 = vmatprep.subr.bf16.mxu0 0
    %1927 = vmatpush2.bf16.msra.mxu0 %v1825
    %1928 = vmatprep.subr.bf16.mxu0 0
    %1929 = vmatpush2.bf16.msra.mxu0 %v1824
    %1930 = vmatprep.subr.bf16.mxu0 0
    %1931 = vmatpush2.bf16.msra.mxu0 %v1823
    %1932 = vmatprep.subr.bf16.mxu0 0
    %1933 = vmatpush2.bf16.msra.mxu0 %v1822
    %1934 = vmatprep.subr.bf16.mxu0 0
    %1935 = vmatpush2.bf16.msra.mxu0 %v1821
    %1936 = vmatprep.subr.bf16.mxu0 0
    %1937 = vmatpush2.bf16.msra.mxu0 %v1820
    %1938 = vmatprep.subr.bf16.mxu0 0
    %1939 = vmatpush2.bf16.msra.mxu0 %v1819
    %1940 = vmatprep.mubr.bf16.mxu0 %v1591
    %1941 = vmatmul.mubr.bf16.gmra.mxu0 %v1590
    %v1942 = vpop.f32.mrf.mxu0
    %v1943 = vadd.f32 %v1894, %v1942
    %v1944 = vpop.f32.mrf.mxu0
    %v1945 = vpop.f32.mrf.mxu0
    %v1946 = vadd.f32 %v1897, %v1945
    %v1947 = vpop.f32.mrf.mxu0
    %1948 = vmatprep.mubr.bf16.mxu0 %v1595
    %1949 = vmatmul.mubr.bf16.gmra.mxu0 %v1594
    %v1950 = vpop.f32.mrf.mxu0
    %v1951 = vadd.f32 %v1902, %v1950
    %v1952 = vpop.f32.mrf.mxu0
    %v1953 = vpop.f32.mrf.mxu0
    %v1954 = vadd.f32 %v1905, %v1953
    %v1955 = vpop.f32.mrf.mxu0
    %1956 = vdwg.mxu0
    %v1957 = vadd.f32 %v1180, %v1943
    %v1958 = vadd.f32 %v1181, %v1946
    %v1959 = vadd.f32 %v1182, %v1951
    %v1960 = vadd.f32 %v1183, %v1954
    %1961 = vst [vmem:[#allocation14] sm:$0xff] %v1957
    %1962 = vst [vmem:[#allocation14 + $0x8] sm:$0xff] %v1958
    %1963 = vst [vmem:[#allocation14 + $0x10] sm:$0xff] %v1959
    %1964 = vst [vmem:[#allocation14 + $0x18] sm:$0xff] %v1960
    // Predicated region
    $region74: #{tpu_custom_call.1} parent=1 // pred_check
      _
    $region75: #{tpu_custom_call.1} parent=1 // pred_check_branch
      %1966 = sbr.rel (0) target = $region77
    $region76: #{tpu_custom_call.1} parent=1 // pred_region
      %s1968 = ssub.s32 512, 512
      %1969 = vsyncadd [#allocation4], %s1968
      %s1970 = sshll.u32 [#allocation14], 4
      %s1971 = int_to_ptr.vmem [resolvable:$true] %s1970
      %1976 = dma.vmem_to_hbm [thread:$0]  %s1971, 512, %s11, [#allocation4], 128, 128, 8
    $region77: #{tpu_custom_call.1} parent=1 // pred_fallthru
      _
    // Predicated region
    $region78: #{tpu_custom_call.1} parent=1 // pred_check
      _
    $region79: #{tpu_custom_call.1} parent=1 // pred_check_branch
      %1978 = sbr.rel (0) target = $region81
    $region80: #{tpu_custom_call.1} parent=1 // pred_region
      %1979 = dma.done [#allocation4], 512
    $region81: #{tpu_custom_call.1} parent=1 // pred_fallthru
      _
    %1980 = vsyncpa [#allocation3], 1
    %1981 = vsyncpa [#allocation6], 1
    %1982 = vsyncpa [#allocation9], 1
    %1983 = vsyncpa [#allocation12], 1
    %1984 = vsyncpa [#allocation4], 1

</llo_original>
